<compile_context>
chip_gen: v6e
topology: v6e:2x2x1
jax: 0.10.0
libtpu: 0.0.40
codegen_flags: <defaults>
</compile_context>

<pallas_src>
import jax
import jax.numpy as jnp
from jax.experimental import pallas as pl
from jax.experimental.pallas import tpu as pltpu

# ---------------- model dimensions (synthetic, small) ----------------
H = W = 16            # image spatial size
C_IN = 3              # input channels (RGB)
C_IN_AUG = C_IN + 1   # +1 ones column -> conv bias folded into the contraction
C_FEAT = 32           # backbone feature channels
N_PROP = 8            # number of detections / proposals
N_CLS = 8             # number of classes
HW = H * W            # 256
MASK_DIM = H * W      # masks predicted at image resolution (flattened)

# Fused head layout (lane-dense, mask block first so its slice is 128-aligned).
MASK_OFF = 0
CLS_OFF = MASK_OFF + MASK_DIM          # 256
BOX_OFF = CLS_OFF + N_CLS              # 264
HEADS_USED = BOX_OFF + 4               # 268
HEADS_PAD = 384                        # pad to a multiple of 128
META_W = 128                           # lane-dense width for small outputs
# meta columns: 0..3 = (x1,y1,x2,y2), 4 = score, 5 = label (f32, exact 0..7)


def _detector_kernel(x_ref, wc_ref, pool_ref, wh_ref, mask_ref, meta_ref):
    """Fused detector hot path for one image of the batch.

    x_ref    : [HW, C_IN_AUG]     image pixels (last column is ones for bias)
    wc_ref   : [C_IN_AUG, C_FEAT] 1x1 conv weight with bias row appended
    pool_ref : [N_PROP, HW]       soft ROI-pooling matrix
    wh_ref   : [C_FEAT, HEADS_PAD] fused [mask | cls | box | 0-pad] head weights
    mask_ref : [N_PROP, MASK_DIM] sigmoid masks
    meta_ref : [N_PROP, META_W]   cols 0:4 boxes, col 4 score, col 5 label (f32)
    """
    x = x_ref[...]                                        # [HW, C_IN_AUG]
    wc = wc_ref[...]                                      # [C_IN_AUG, C_FEAT]

    # Backbone 1x1 conv (bias folded via the ones column): K=4 contraction
    # done as 4 VPU broadcast-FMAs -> no serial MXU fill/drain for a tiny K,
    # and features land directly in [HW, C_FEAT] so the pooling matmul is NN.
    feat = x[:, 0:1] * wc[0:1, :]
    for c in range(1, C_IN_AUG):                          # unrolled at trace time
        feat = feat + x[:, c:c + 1] * wc[c:c + 1, :]
    feat = jnp.maximum(feat, 0.0)                         # [HW, C_FEAT]

    # Proposal pooling: plain NN matmul, contract over HW (K=256 fills lanes).
    prop = jnp.dot(pool_ref[...], feat,
                   preferred_element_type=jnp.float32)    # [N_PROP, C_FEAT]

    # Fused heads: single MXU pass over all mask/cls/box columns.
    heads = jnp.dot(prop, wh_ref[...],
                    preferred_element_type=jnp.float32)   # [N_PROP, HEADS_PAD]

    mask_logits = heads[:, MASK_OFF:MASK_OFF + MASK_DIM]  # [N_PROP, 256]
    cls_logits = heads[:, CLS_OFF:CLS_OFF + N_CLS]        # [N_PROP, 8]
    box_logits = heads[:, BOX_OFF:BOX_OFF + 4]            # [N_PROP, 4]

    # Mask head: sigmoid via EUP exp + EUP approx reciprocal, clamped to [0,1].
    masks = pl.reciprocal(1.0 + jnp.exp(-mask_logits), approx=True)
    mask_ref[...] = jnp.minimum(jnp.maximum(masks, 0.0), 1.0)

    # Box head: sigmoid-normalized params -> (x1, y1, x2, y2) corner decode.
    box_s = pl.reciprocal(1.0 + jnp.exp(-box_logits), approx=True)
    box_s = jnp.minimum(jnp.maximum(box_s, 0.0), 1.0)
    x1 = box_s[:, 0:1] * W
    y1 = box_s[:, 1:2] * H
    x2 = x1 + box_s[:, 2:3] * (W - x1)
    y2 = y1 + box_s[:, 3:4] * (H - y1)

    # Classification: labels = argmax(logits); score = max softmax probability
    #                = 1 / sum(exp(logits - max)).  Clamped (approx recip can
    #                slightly exceed 1 when the denominator is ~1).
    m = jnp.max(cls_logits, axis=-1, keepdims=True)
    e = jnp.exp(cls_logits - m)
    score = pl.reciprocal(jnp.sum(e, axis=-1, keepdims=True), approx=True)
    score = jnp.minimum(jnp.maximum(score, 0.0), 1.0)

    # First-occurrence argmax (matches torch.argmax tie-breaking), as f32.
    ids = jax.lax.broadcasted_iota(jnp.int32, (N_PROP, N_CLS), 1)
    label = jnp.min(jnp.where(cls_logits == m, ids, N_CLS),
                    axis=-1, keepdims=True).astype(jnp.float32)

    # Lane-dense packing of the small outputs (one unmasked full-tile store).
    col = jax.lax.broadcasted_iota(jnp.int32, (N_PROP, META_W), 1)
    meta = (jnp.where(col == 0, x1, 0.0)
            + jnp.where(col == 1, y1, 0.0)
            + jnp.where(col == 2, x2, 0.0)
            + jnp.where(col == 3, y2, 0.0)
            + jnp.where(col == 4, score, 0.0)
            + jnp.where(col == 5, label, 0.0))
    meta_ref[...] = meta


def _weight_spec(shape):
    # Batch-invariant parameter: whole array as one block, constant index map.
    return pl.BlockSpec(shape, lambda b: tuple(0 for _ in shape))


def maskrcnn_forward_batched(x_nchw, params):
    """Runs the fused detector for every image in the batch.

    Returns (boxes[B,N,4], labels[B,N] int32, scores[B,N], masks[B,N,1,H,W]).
    """
    B = x_nchw.shape[0]
    assert x_nchw.shape == (B, C_IN, H, W)

    # Tiny host-side layout fix: [B,C,H,W] -> [B, HW, C] and append a ones
    # column so the conv bias rides inside the contraction (no bias input).
    x_hw_c = jnp.transpose(x_nchw.reshape(B, C_IN, HW), (0, 2, 1)).astype(jnp.float32)
    x_aug = jnp.concatenate(
        [x_hw_c, jnp.ones((B, HW, 1), jnp.float32)], axis=-1)   # [B, HW, 4]

    wc, pool, wh = (params[k] for k in ("w_conv_aug", "pool", "w_heads"))

    cost = pl.CostEstimate(
        flops=2 * B * (HW * C_IN_AUG * C_FEAT
                       + N_PROP * HW * C_FEAT
                       + N_PROP * C_FEAT * HEADS_PAD),
        transcendentals=B * N_PROP * (2 * MASK_DIM + 2 * N_CLS + 16),
        bytes_accessed=4 * (B * (HW * C_IN_AUG + N_PROP * (MASK_DIM + META_W))
                            + C_IN_AUG * C_FEAT + N_PROP * HW
                            + C_FEAT * HEADS_PAD),
    )

    masks_flat, meta = pl.pallas_call(
        _detector_kernel,
        grid=(B,),
        out_shape=(
            jax.ShapeDtypeStruct((B, N_PROP, MASK_DIM), jnp.float32),
            jax.ShapeDtypeStruct((B, N_PROP, META_W), jnp.float32),
        ),
        in_specs=[
            pl.BlockSpec((None, HW, C_IN_AUG), lambda b: (b, 0, 0)),
            _weight_spec(wc.shape),
            _weight_spec(pool.shape),
            _weight_spec(wh.shape),
        ],
        out_specs=(
            pl.BlockSpec((None, N_PROP, MASK_DIM), lambda b: (b, 0, 0)),
            pl.BlockSpec((None, N_PROP, META_W), lambda b: (b, 0, 0)),
        ),
        compiler_params=pltpu.CompilerParams(
            dimension_semantics=("parallel",),
            vmem_limit_bytes=4 * 1024 * 1024),
        cost_estimate=cost,
    )(x_aug, wc, pool, wh)

    # Only cheap slices / reshapes remain outside the kernel.
    boxes = meta[:, :, 0:4]
    scores = meta[:, :, 4]
    # TODO(synk): torch returns int64 labels; TPU kernel path uses int32.
    labels = meta[:, :, 5].astype(jnp.int32)
    masks = masks_flat.reshape(B, N_PROP, 1, H, W)
    return boxes, labels, scores, masks


def maskrcnn_wrapper_forward(x_nchw, params):
    """Mirrors MaskRCNNWrapper.forward: unpack outputs[0] -> first image."""
    boxes, labels, scores, masks = maskrcnn_forward_batched(x_nchw, params)
    return boxes[0], labels[0], scores[0], masks[0]


def init_params(key):
    ks = jax.random.split(key, 6)
    w_conv = 0.5 * jax.random.normal(ks[0], (C_IN, C_FEAT), jnp.float32)
    b_conv = 0.1 * jax.random.normal(ks[1], (1, C_FEAT), jnp.float32)
    pool_logits = jax.random.normal(ks[2], (N_PROP, HW), jnp.float32)
    pool = jax.nn.softmax(pool_logits, axis=-1)          # rows sum to 1
    w_box = 0.5 * jax.random.normal(ks[3], (C_FEAT, 4), jnp.float32)
    w_cls = 0.5 * jax.random.normal(ks[4], (C_FEAT, N_CLS), jnp.float32)
    w_mask = 0.5 * jax.random.normal(ks[5], (C_FEAT, MASK_DIM), jnp.float32)

    # One-time (init) repacking into the fused kernel layouts.
    w_conv_aug = jnp.concatenate([w_conv, b_conv], axis=0)   # [C_IN_AUG, C_FEAT]

    w_heads = jnp.zeros((C_FEAT, HEADS_PAD), jnp.float32)
    w_heads = w_heads.at[:, MASK_OFF:MASK_OFF + MASK_DIM].set(w_mask)
    w_heads = w_heads.at[:, CLS_OFF:CLS_OFF + N_CLS].set(w_cls)
    w_heads = w_heads.at[:, BOX_OFF:BOX_OFF + 4].set(w_box)

    return dict(w_conv_aug=w_conv_aug, pool=pool, w_heads=w_heads)


if __name__ == "__main__":
    key = jax.random.PRNGKey(0)
    pkey, xkey = jax.random.split(key)
    params = init_params(pkey)
    B = 2
    x = jax.random.uniform(xkey, (B, C_IN, H, W), jnp.float32)  # NCHW like torch

    # Batched path (all images), then the torch-wrapper view (outputs[0]).
    boxes_b, labels_b, scores_b, masks_b = jax.block_until_ready(
        maskrcnn_forward_batched(x, params))
    boxes, labels, scores, masks = jax.block_until_ready(
        maskrcnn_wrapper_forward(x, params))

    assert boxes_b.shape == (B, N_PROP, 4)
    assert masks_b.shape == (B, N_PROP, 1, H, W)
    assert boxes.shape == (N_PROP, 4) and boxes.dtype == jnp.float32
    assert labels.shape == (N_PROP,) and labels.dtype == jnp.int32
    assert scores.shape == (N_PROP,) and scores.dtype == jnp.float32
    assert masks.shape == (N_PROP, 1, H, W) and masks.dtype == jnp.float32
    assert bool(jnp.all(boxes[:, 2] >= boxes[:, 0]))
    assert bool(jnp.all(boxes[:, 3] >= boxes[:, 1]))
    assert bool(jnp.all((labels >= 0) & (labels < N_CLS)))
    assert bool(jnp.all(scores >= 0.0) and jnp.all(scores <= 1.0))
    assert bool(jnp.all(masks >= 0.0) and jnp.all(masks <= 1.0))
    print("KERNEL_OK")
</pallas_src>

<mosaic_0001>
module attributes {stable_mosaic.version = 11 : i64} {
  func.func @_detector_kernel(%arg0: i32, %arg1: memref<1x256x4xf32, #tpu.memory_space<vmem>>, %arg2: memref<4x32xf32, #tpu.memory_space<vmem>>, %arg3: memref<8x256xf32, #tpu.memory_space<vmem>>, %arg4: memref<32x384xf32, #tpu.memory_space<vmem>>, %arg5: memref<1x8x256xf32, #tpu.memory_space<vmem>>, %arg6: memref<1x8x128xf32, #tpu.memory_space<vmem>>) attributes {dimension_semantics = [#tpu.dimension_semantics<parallel>], iteration_bounds = array<i64: 2>, scalar_prefetch = 0 : i64, scratch_operands = 0 : i64, tpu.core_type = #tpu.core_type<tc>, window_params = [{transform_indices = @transform_0, window_bounds = array<i64: 1, 256, 4>}, {pipeline_mode = #tpu.pipeline_mode<synchronous>, transform_indices = @transform_1, window_bounds = array<i64: 4, 32>}, {pipeline_mode = #tpu.pipeline_mode<synchronous>, transform_indices = @transform_2, window_bounds = array<i64: 8, 256>}, {pipeline_mode = #tpu.pipeline_mode<synchronous>, transform_indices = @transform_3, window_bounds = array<i64: 32, 384>}, {transform_indices = @transform_4, window_bounds = array<i64: 1, 8, 256>}, {transform_indices = @transform_5, window_bounds = array<i64: 1, 8, 128>}]} {
    %c0 = arith.constant 0 : index
    %c0_0 = arith.constant 0 : index
    %c0_1 = arith.constant 0 : index
    %0 = vector.load %arg1[%c0, %c0_0, %c0_1] : memref<1x256x4xf32, #tpu.memory_space<vmem>>, vector<1x256x4xf32>
    %1 = vector.shape_cast %0 : vector<1x256x4xf32> to vector<256x4xf32>
    %c0_2 = arith.constant 0 : index
    %c0_3 = arith.constant 0 : index
    %2 = vector.load %arg2[%c0_2, %c0_3] : memref<4x32xf32, #tpu.memory_space<vmem>>, vector<4x32xf32>
    %3 = vector.extract_strided_slice %1 {offsets = [0, 0], sizes = [256, 1], strides = [1, 1]} : vector<256x4xf32> to vector<256x1xf32>
    %4 = vector.extract_strided_slice %2 {offsets = [0, 0], sizes = [1, 32], strides = [1, 1]} : vector<4x32xf32> to vector<1x32xf32>
    %5 = vector.broadcast %3 : vector<256x1xf32> to vector<256x32xf32>
    %6 = vector.broadcast %4 : vector<1x32xf32> to vector<256x32xf32>
    %7 = arith.mulf %5, %6 : vector<256x32xf32>
    %8 = vector.extract_strided_slice %1 {offsets = [0, 1], sizes = [256, 1], strides = [1, 1]} : vector<256x4xf32> to vector<256x1xf32>
    %9 = vector.extract_strided_slice %2 {offsets = [1, 0], sizes = [1, 32], strides = [1, 1]} : vector<4x32xf32> to vector<1x32xf32>
    %10 = vector.broadcast %8 : vector<256x1xf32> to vector<256x32xf32>
    %11 = vector.broadcast %9 : vector<1x32xf32> to vector<256x32xf32>
    %12 = arith.mulf %10, %11 : vector<256x32xf32>
    %13 = arith.addf %7, %12 : vector<256x32xf32>
    %14 = vector.extract_strided_slice %1 {offsets = [0, 2], sizes = [256, 1], strides = [1, 1]} : vector<256x4xf32> to vector<256x1xf32>
    %15 = vector.extract_strided_slice %2 {offsets = [2, 0], sizes = [1, 32], strides = [1, 1]} : vector<4x32xf32> to vector<1x32xf32>
    %16 = vector.broadcast %14 : vector<256x1xf32> to vector<256x32xf32>
    %17 = vector.broadcast %15 : vector<1x32xf32> to vector<256x32xf32>
    %18 = arith.mulf %16, %17 : vector<256x32xf32>
    %19 = arith.addf %13, %18 : vector<256x32xf32>
    %20 = vector.extract_strided_slice %1 {offsets = [0, 3], sizes = [256, 1], strides = [1, 1]} : vector<256x4xf32> to vector<256x1xf32>
    %21 = vector.extract_strided_slice %2 {offsets = [3, 0], sizes = [1, 32], strides = [1, 1]} : vector<4x32xf32> to vector<1x32xf32>
    %22 = vector.broadcast %20 : vector<256x1xf32> to vector<256x32xf32>
    %23 = vector.broadcast %21 : vector<1x32xf32> to vector<256x32xf32>
    %24 = arith.mulf %22, %23 : vector<256x32xf32>
    %25 = arith.addf %19, %24 : vector<256x32xf32>
    %cst = arith.constant 0.000000e+00 : f32
    %26 = vector.broadcast %cst : f32 to vector<256x32xf32>
    %27 = arith.maximumf %25, %26 : vector<256x32xf32>
    %c0_4 = arith.constant 0 : index
    %c0_5 = arith.constant 0 : index
    %28 = vector.load %arg3[%c0_4, %c0_5] : memref<8x256xf32, #tpu.memory_space<vmem>>, vector<8x256xf32>
    %cst_6 = arith.constant dense<0.000000e+00> : vector<8x32xf32>
    %29 = tpu.matmul %28, %27, %cst_6 {dimension_numbers = #tpu.dot_dimension_numbers<[1], [0], [0], [1], [0, 0, 1, 1], [], []>} : vector<8x256xf32>, vector<256x32xf32>, vector<8x32xf32> -> vector<8x32xf32>
    %c0_7 = arith.constant 0 : index
    %c0_8 = arith.constant 0 : index
    %30 = vector.load %arg4[%c0_7, %c0_8] : memref<32x384xf32, #tpu.memory_space<vmem>>, vector<32x384xf32>
    %cst_9 = arith.constant dense<0.000000e+00> : vector<8x384xf32>
    %31 = tpu.matmul %29, %30, %cst_9 {dimension_numbers = #tpu.dot_dimension_numbers<[1], [0], [0], [1], [0, 0, 1, 1], [], []>} : vector<8x32xf32>, vector<32x384xf32>, vector<8x384xf32> -> vector<8x384xf32>
    %32 = vector.extract_strided_slice %31 {offsets = [0, 0], sizes = [8, 256], strides = [1, 1]} : vector<8x384xf32> to vector<8x256xf32>
    %33 = vector.extract_strided_slice %31 {offsets = [0, 256], sizes = [8, 8], strides = [1, 1]} : vector<8x384xf32> to vector<8x8xf32>
    %34 = vector.extract_strided_slice %31 {offsets = [0, 264], sizes = [8, 4], strides = [1, 1]} : vector<8x384xf32> to vector<8x4xf32>
    %cst_10 = arith.constant 0.000000e+00 : f32
    %35 = vector.broadcast %cst_10 : f32 to vector<8x256xf32>
    %36 = arith.subf %35, %32 : vector<8x256xf32>
    %37 = math.exp %36 : vector<8x256xf32>
    %cst_11 = arith.constant 1.000000e+00 : f32
    %38 = vector.broadcast %cst_11 : f32 to vector<8x256xf32>
    %39 = arith.addf %38, %37 : vector<8x256xf32>
    %40 = tpu.reciprocal %39 {approx = true} : vector<8x256xf32> -> vector<8x256xf32>
    %cst_12 = arith.constant 0.000000e+00 : f32
    %41 = vector.broadcast %cst_12 : f32 to vector<8x256xf32>
    %42 = arith.maximumf %40, %41 : vector<8x256xf32>
    %cst_13 = arith.constant 1.000000e+00 : f32
    %43 = vector.broadcast %cst_13 : f32 to vector<8x256xf32>
    %44 = arith.minimumf %42, %43 : vector<8x256xf32>
    %c0_14 = arith.constant 0 : index
    %c0_15 = arith.constant 0 : index
    %c0_16 = arith.constant 0 : index
    %45 = vector.load %arg5[%c0_14, %c0_15, %c0_16] : memref<1x8x256xf32, #tpu.memory_space<vmem>>, vector<1x8x256xf32>
    %46 = vector.shape_cast %45 : vector<1x8x256xf32> to vector<8x256xf32>
    %47 = vector.shape_cast %44 : vector<8x256xf32> to vector<1x8x256xf32>
    tpu.vector_store %arg5[%c0_14, %c0_15, %c0_16], %47 {strides = array<i32>} : memref<1x8x256xf32, #tpu.memory_space<vmem>>, vector<1x8x256xf32>,
    %cst_17 = arith.constant 0.000000e+00 : f32
    %48 = vector.broadcast %cst_17 : f32 to vector<8x4xf32>
    %49 = arith.subf %48, %34 : vector<8x4xf32>
    %50 = math.exp %49 : vector<8x4xf32>
    %cst_18 = arith.constant 1.000000e+00 : f32
    %51 = vector.broadcast %cst_18 : f32 to vector<8x4xf32>
    %52 = arith.addf %51, %50 : vector<8x4xf32>
    %53 = tpu.reciprocal %52 {approx = true} : vector<8x4xf32> -> vector<8x4xf32>
    %cst_19 = arith.constant 0.000000e+00 : f32
    %54 = vector.broadcast %cst_19 : f32 to vector<8x4xf32>
    %55 = arith.maximumf %53, %54 : vector<8x4xf32>
    %cst_20 = arith.constant 1.000000e+00 : f32
    %56 = vector.broadcast %cst_20 : f32 to vector<8x4xf32>
    %57 = arith.minimumf %55, %56 : vector<8x4xf32>
    %58 = vector.extract_strided_slice %57 {offsets = [0, 0], sizes = [8, 1], strides = [1, 1]} : vector<8x4xf32> to vector<8x1xf32>
    %cst_21 = arith.constant 1.600000e+01 : f32
    %59 = vector.broadcast %cst_21 : f32 to vector<8x1xf32>
    %60 = arith.mulf %58, %59 : vector<8x1xf32>
    %61 = vector.extract_strided_slice %57 {offsets = [0, 1], sizes = [8, 1], strides = [1, 1]} : vector<8x4xf32> to vector<8x1xf32>
    %cst_22 = arith.constant 1.600000e+01 : f32
    %62 = vector.broadcast %cst_22 : f32 to vector<8x1xf32>
    %63 = arith.mulf %61, %62 : vector<8x1xf32>
    %64 = vector.extract_strided_slice %57 {offsets = [0, 2], sizes = [8, 1], strides = [1, 1]} : vector<8x4xf32> to vector<8x1xf32>
    %cst_23 = arith.constant 1.600000e+01 : f32
    %65 = vector.broadcast %cst_23 : f32 to vector<8x1xf32>
    %66 = arith.subf %65, %60 : vector<8x1xf32>
    %67 = arith.mulf %64, %66 : vector<8x1xf32>
    %68 = arith.addf %60, %67 : vector<8x1xf32>
    %69 = vector.extract_strided_slice %57 {offsets = [0, 3], sizes = [8, 1], strides = [1, 1]} : vector<8x4xf32> to vector<8x1xf32>
    %cst_24 = arith.constant 1.600000e+01 : f32
    %70 = vector.broadcast %cst_24 : f32 to vector<8x1xf32>
    %71 = arith.subf %70, %63 : vector<8x1xf32>
    %72 = arith.mulf %69, %71 : vector<8x1xf32>
    %73 = arith.addf %63, %72 : vector<8x1xf32>
    %cst_25 = arith.constant dense<0xFF800000> : vector<8xf32>
    %74 = vector.multi_reduction <maximumf>, %33, %cst_25 [1] : vector<8x8xf32> to vector<8xf32>
    %75 = vector.shape_cast %74 : vector<8xf32> to vector<8x1xf32>
    %76 = vector.broadcast %75 : vector<8x1xf32> to vector<8x8xf32>
    %77 = arith.subf %33, %76 : vector<8x8xf32>
    %78 = math.exp %77 : vector<8x8xf32>
    %cst_26 = arith.constant dense<0.000000e+00> : vector<8xf32>
    %79 = vector.multi_reduction <add>, %78, %cst_26 [1] : vector<8x8xf32> to vector<8xf32>
    %80 = vector.shape_cast %79 : vector<8xf32> to vector<8x1xf32>
    %81 = tpu.reciprocal %80 {approx = true} : vector<8x1xf32> -> vector<8x1xf32>
    %cst_27 = arith.constant 0.000000e+00 : f32
    %82 = vector.broadcast %cst_27 : f32 to vector<8x1xf32>
    %83 = arith.maximumf %81, %82 : vector<8x1xf32>
    %cst_28 = arith.constant 1.000000e+00 : f32
    %84 = vector.broadcast %cst_28 : f32 to vector<8x1xf32>
    %85 = arith.minimumf %83, %84 : vector<8x1xf32>
    %86 = tpu.iota {dimensions = array<i32: 1>} : vector<8x8xi32>
    %87 = vector.broadcast %75 : vector<8x1xf32> to vector<8x8xf32>
    %88 = arith.cmpf oeq, %33, %87 : vector<8x8xf32>
    %c8_i32 = arith.constant 8 : i32
    %89 = vector.broadcast %c8_i32 : i32 to vector<8x8xi32>
    %90 = arith.select %88, %86, %89 : vector<8x8xi1>, vector<8x8xi32>
    %cst_29 = arith.constant dense<2147483647> : vector<8xi32>
    %91 = vector.multi_reduction <minsi>, %90, %cst_29 [1] : vector<8x8xi32> to vector<8xi32>
    %92 = vector.shape_cast %91 : vector<8xi32> to vector<8x1xi32>
    %93 = arith.sitofp %92 : vector<8x1xi32> to vector<8x1xf32>
    %94 = tpu.iota {dimensions = array<i32: 1>} : vector<8x128xi32>
    %c0_i32 = arith.constant 0 : i32
    %95 = vector.broadcast %c0_i32 : i32 to vector<8x128xi32>
    %96 = arith.cmpi eq, %94, %95 : vector<8x128xi32>
    %cst_30 = arith.constant 0.000000e+00 : f32
    %97 = vector.shape_cast %60 : vector<8x1xf32> to vector<8x1xf32>
    %98 = vector.broadcast %97 : vector<8x1xf32> to vector<8x128xf32>
    %99 = vector.broadcast %cst_30 : f32 to vector<8x128xf32>
    %100 = arith.select %96, %98, %99 : vector<8x128xi1>, vector<8x128xf32>
    %c1_i32 = arith.constant 1 : i32
    %101 = vector.broadcast %c1_i32 : i32 to vector<8x128xi32>
    %102 = arith.cmpi eq, %94, %101 : vector<8x128xi32>
    %cst_31 = arith.constant 0.000000e+00 : f32
    %103 = vector.shape_cast %63 : vector<8x1xf32> to vector<8x1xf32>
    %104 = vector.broadcast %103 : vector<8x1xf32> to vector<8x128xf32>
    %105 = vector.broadcast %cst_31 : f32 to vector<8x128xf32>
    %106 = arith.select %102, %104, %105 : vector<8x128xi1>, vector<8x128xf32>
    %107 = arith.addf %100, %106 : vector<8x128xf32>
    %c2_i32 = arith.constant 2 : i32
    %108 = vector.broadcast %c2_i32 : i32 to vector<8x128xi32>
    %109 = arith.cmpi eq, %94, %108 : vector<8x128xi32>
    %cst_32 = arith.constant 0.000000e+00 : f32
    %110 = vector.shape_cast %68 : vector<8x1xf32> to vector<8x1xf32>
    %111 = vector.broadcast %110 : vector<8x1xf32> to vector<8x128xf32>
    %112 = vector.broadcast %cst_32 : f32 to vector<8x128xf32>
    %113 = arith.select %109, %111, %112 : vector<8x128xi1>, vector<8x128xf32>
    %114 = arith.addf %107, %113 : vector<8x128xf32>
    %c3_i32 = arith.constant 3 : i32
    %115 = vector.broadcast %c3_i32 : i32 to vector<8x128xi32>
    %116 = arith.cmpi eq, %94, %115 : vector<8x128xi32>
    %cst_33 = arith.constant 0.000000e+00 : f32
    %117 = vector.shape_cast %73 : vector<8x1xf32> to vector<8x1xf32>
    %118 = vector.broadcast %117 : vector<8x1xf32> to vector<8x128xf32>
    %119 = vector.broadcast %cst_33 : f32 to vector<8x128xf32>
    %120 = arith.select %116, %118, %119 : vector<8x128xi1>, vector<8x128xf32>
    %121 = arith.addf %114, %120 : vector<8x128xf32>
    %c4_i32 = arith.constant 4 : i32
    %122 = vector.broadcast %c4_i32 : i32 to vector<8x128xi32>
    %123 = arith.cmpi eq, %94, %122 : vector<8x128xi32>
    %cst_34 = arith.constant 0.000000e+00 : f32
    %124 = vector.shape_cast %85 : vector<8x1xf32> to vector<8x1xf32>
    %125 = vector.broadcast %124 : vector<8x1xf32> to vector<8x128xf32>
    %126 = vector.broadcast %cst_34 : f32 to vector<8x128xf32>
    %127 = arith.select %123, %125, %126 : vector<8x128xi1>, vector<8x128xf32>
    %128 = arith.addf %121, %127 : vector<8x128xf32>
    %c5_i32 = arith.constant 5 : i32
    %129 = vector.broadcast %c5_i32 : i32 to vector<8x128xi32>
    %130 = arith.cmpi eq, %94, %129 : vector<8x128xi32>
    %cst_35 = arith.constant 0.000000e+00 : f32
    %131 = vector.shape_cast %93 : vector<8x1xf32> to vector<8x1xf32>
    %132 = vector.broadcast %131 : vector<8x1xf32> to vector<8x128xf32>
    %133 = vector.broadcast %cst_35 : f32 to vector<8x128xf32>
    %134 = arith.select %130, %132, %133 : vector<8x128xi1>, vector<8x128xf32>
    %135 = arith.addf %128, %134 : vector<8x128xf32>
    %c0_36 = arith.constant 0 : index
    %c0_37 = arith.constant 0 : index
    %c0_38 = arith.constant 0 : index
    %136 = vector.load %arg6[%c0_36, %c0_37, %c0_38] : memref<1x8x128xf32, #tpu.memory_space<vmem>>, vector<1x8x128xf32>
    %137 = vector.shape_cast %136 : vector<1x8x128xf32> to vector<8x128xf32>
    %138 = vector.shape_cast %135 : vector<8x128xf32> to vector<1x8x128xf32>
    tpu.vector_store %arg6[%c0_36, %c0_37, %c0_38], %138 {strides = array<i32>} : memref<1x8x128xf32, #tpu.memory_space<vmem>>, vector<1x8x128xf32>,
    return
  }
  func.func @transform_0(%arg0: i32) -> (i32, i32, i32) {
    %c0_i32 = arith.constant 0 : i32
    %c0_i32_0 = arith.constant 0 : i32
    %c0_i32_1 = arith.constant 0 : i32
    return %arg0, %c0_i32, %c0_i32_0 : i32, i32, i32
  }
  func.func @transform_1(%arg0: i32) -> (i32, i32) {
    %c0_i32 = arith.constant 0 : i32
    %c0_i32_0 = arith.constant 0 : i32
    %c0_i32_1 = arith.constant 0 : i32
    return %c0_i32, %c0_i32_0 : i32, i32
  }
  func.func @transform_2(%arg0: i32) -> (i32, i32) {
    %c0_i32 = arith.constant 0 : i32
    %c0_i32_0 = arith.constant 0 : i32
    %c0_i32_1 = arith.constant 0 : i32
    return %c0_i32, %c0_i32_0 : i32, i32
  }
  func.func @transform_3(%arg0: i32) -> (i32, i32) {
    %c0_i32 = arith.constant 0 : i32
    %c0_i32_0 = arith.constant 0 : i32
    %c0_i32_1 = arith.constant 0 : i32
    return %c0_i32, %c0_i32_0 : i32, i32
  }
  func.func @transform_4(%arg0: i32) -> (i32, i32, i32) {
    %c0_i32 = arith.constant 0 : i32
    %c0_i32_0 = arith.constant 0 : i32
    %c0_i32_1 = arith.constant 0 : i32
    return %arg0, %c0_i32, %c0_i32_0 : i32, i32, i32
  }
  func.func @transform_5(%arg0: i32) -> (i32, i32, i32) {
    %c0_i32 = arith.constant 0 : i32
    %c0_i32_0 = arith.constant 0 : i32
    %c0_i32_1 = arith.constant 0 : i32
    return %arg0, %c0_i32, %c0_i32_0 : i32, i32, i32
  }
}

</mosaic_0001>

<llo_original>
// kernel: tpu_custom_call.1
$region0: #{tpu_custom_call.1}
  #allocation0 [shape = 'u32[]', space=smem, size = 0x4, offset = 0x4, fixed_abs, tag = 'smem constant byte address 0x4 - core index']
  #allocation1 [shape = 'u32[144,128]{1,0:T(1,128)}', space=vmem, size = 0x12000, scoped, tag = 'internal scratch']
  %s0 = inlined_call_operand.vmem [shape: f32[2,256,4], index: 0, kind: input, shape index: {}]
  %s1 = inlined_call_operand.vmem [shape: f32[4,32], index: 1, kind: input, shape index: {}]
  %s2 = inlined_call_operand.vmem [shape: f32[8,256], index: 2, kind: input, shape index: {}]
  %s3 = inlined_call_operand.vmem [shape: f32[32,384], index: 3, kind: input, shape index: {}]
  %s4 = inlined_call_operand.hbm [shape: f32[2,8,256], index: 4, kind: output, shape index: {0}]
  %s5 = inlined_call_operand.hbm [shape: f32[2,8,128], index: 5, kind: output, shape index: {1}]
  %6 = xla_tuple %s4, %s5
  %s7 = sld [smem:[#allocation0]]
  $region57: #{tpu_custom_call.1} parent=0
    _
  %s9 = ssub.s32 1, %s7
  %s10 = scalar_select 0, %s9, %s7
  $region1: #{tpu_custom_call.1} parent=0
    #allocation2 [shape = 'u8[16384]{0}', space=vmem, size = 0x4000, scoped, tag = 'output window, operand 0']
    #allocation3 [shape = 's32[2]{0}', space=sflag, size = 0x8, scoped, tag = 'scoped memory for tpu_custom_call.1']
    #allocation4 [shape = 'u8[8192]{0}', space=vmem, size = 0x2000, scoped, tag = 'output window, operand 1']
    #allocation5 [shape = 's32[2]{0}', space=sflag, size = 0x8, scoped, tag = 'scoped memory for tpu_custom_call.1']
    %11 = vsyncpa [#allocation3], 0
    %s12 = scalar_lea.sflag [#allocation3], 1
    %13 = vsyncpa %s12, 0
    %14 = vsyncpa [#allocation5], 0
    %s15 = scalar_lea.sflag [#allocation5], 1
    %16 = vsyncpa %s15, 0
    loop: start=0, step=1, limit=4
    $region2: #{tpu_custom_call.1} parent=1 // loop_pre_header
      _
    $region3: #{tpu_custom_call.1} parent=1 // loop_header
      %s18 = sphi 0, %s22
      %p19 = scmp.ge.s32.totalorder %s18, 4
      %s28 = sphi 0, %s30
      %s31 = sphi 0, %s28
      %s32 = sphi 0, %s31
      %s48 = sphi 0, %s32
      %s52 = sphi 0, %s52
      %s54 = sphi 0, %s52
      %s55 = sphi 0, %s54
      %s69 = sphi 0, %s55
      %s73 = sphi 0, %s73
      %s75 = sphi 0, %s73
      %s76 = sphi 0, %s75
      %s90 = sphi 0, %s76
      %s94 = sphi 0, %s94
      %s96 = sphi 0, %s94
      %s97 = sphi 0, %s96
      %s111 = sphi 0, %s97
      %s117 = sphi 0, %s119
      %s120 = sphi 0, %s117
      %s121 = sphi 0, %s120
      %s137 = sphi 0, %s121
      %s143 = sphi 0, %s145
      %s146 = sphi 0, %s143
      %s147 = sphi 0, %s146
      %s163 = sphi 0, %s147
    $region4: #{tpu_custom_call.1} parent=1 // loop_header_branch
      %21 = sbr.rel (%p19) target = $region8
    $region5: #{tpu_custom_call.1} parent=1 // loop_body
      %s23 = ssub.s32 %s18, 1
      %s24 = ssub.s32 %s18, 2
      %s25 = sadd.s32 %s18, 1
      %s26 = ssub.s32 %s18, %s25
      %p27 = scmp.eq.s32.totalorder %s26, 0
      %s29 = sadd.s32 %s28, 1
      %s30 = scalar_select %p27, %s28, %s29
      %p33 = pneg %p27
      %p34 = scmp.eq.s32.totalorder %s18, 1
      %p35 = por %p33, %p34
      %p36 = scmp.ne.s32.totalorder %s28, %s31
      %p37 = scmp.eq.s32.totalorder %s18, 0
      %p38 = por %p36, %p37
      %p39 = scmp.ne.s32.totalorder %s28, %s31
      %p40 = scmp.eq.s32.totalorder %s23, 1
      %p41 = por %p39, %p40
      %p42 = scmp.ne.s32.totalorder %s31, %s32
      %p43 = scmp.eq.s32.totalorder %s23, 0
      %p44 = por %p42, %p43
      %p45 = scmp.ne.s32.totalorder %s31, %s32
      %p46 = scmp.eq.s32.totalorder %s24, 1
      %p47 = por %p45, %p46
      %p49 = scmp.ne.s32.totalorder %s32, %s48
      %p50 = scmp.eq.s32.totalorder %s24, 0
      %p51 = por %p49, %p50
      %s53 = sadd.s32 %s52, 1
      %p56 = scmp.eq.s32.totalorder %s18, 1
      %p57 = scmp.ne.s32.totalorder %s52, %s54
      %p58 = scmp.eq.s32.totalorder %s18, 0
      %p59 = por %p57, %p58
      %p60 = scmp.ne.s32.totalorder %s52, %s54
      %p61 = scmp.eq.s32.totalorder %s23, 1
      %p62 = por %p60, %p61
      %p63 = scmp.ne.s32.totalorder %s54, %s55
      %p64 = scmp.eq.s32.totalorder %s23, 0
      %p65 = por %p63, %p64
      %p66 = scmp.ne.s32.totalorder %s54, %s55
      %p67 = scmp.eq.s32.totalorder %s24, 1
      %p68 = por %p66, %p67
      %p70 = scmp.ne.s32.totalorder %s55, %s69
      %p71 = scmp.eq.s32.totalorder %s24, 0
      %p72 = por %p70, %p71
      %s74 = sadd.s32 %s73, 1
      %p77 = scmp.eq.s32.totalorder %s18, 1
      %p78 = scmp.ne.s32.totalorder %s73, %s75
      %p79 = scmp.eq.s32.totalorder %s18, 0
      %p80 = por %p78, %p79
      %p81 = scmp.ne.s32.totalorder %s73, %s75
      %p82 = scmp.eq.s32.totalorder %s23, 1
      %p83 = por %p81, %p82
      %p84 = scmp.ne.s32.totalorder %s75, %s76
      %p85 = scmp.eq.s32.totalorder %s23, 0
      %p86 = por %p84, %p85
      %p87 = scmp.ne.s32.totalorder %s75, %s76
      %p88 = scmp.eq.s32.totalorder %s24, 1
      %p89 = por %p87, %p88
      %p91 = scmp.ne.s32.totalorder %s76, %s90
      %p92 = scmp.eq.s32.totalorder %s24, 0
      %p93 = por %p91, %p92
      %s95 = sadd.s32 %s94, 1
      %p98 = scmp.eq.s32.totalorder %s18, 1
      %p99 = scmp.ne.s32.totalorder %s94, %s96
      %p100 = scmp.eq.s32.totalorder %s18, 0
      %p101 = por %p99, %p100
      %p102 = scmp.ne.s32.totalorder %s94, %s96
      %p103 = scmp.eq.s32.totalorder %s23, 1
      %p104 = por %p102, %p103
      %p105 = scmp.ne.s32.totalorder %s96, %s97
      %p106 = scmp.eq.s32.totalorder %s23, 0
      %p107 = por %p105, %p106
      %p108 = scmp.ne.s32.totalorder %s96, %s97
      %p109 = scmp.eq.s32.totalorder %s24, 1
      %p110 = por %p108, %p109
      %p112 = scmp.ne.s32.totalorder %s97, %s111
      %p113 = scmp.eq.s32.totalorder %s24, 0
      %p114 = por %p112, %p113
      %s115 = ssub.s32 %s18, %s25
      %p116 = scmp.eq.s32.totalorder %s115, 0
      %s118 = sadd.s32 %s117, 1
      %s119 = scalar_select %p116, %s117, %s118
      %p122 = pneg %p116
      %p123 = scmp.eq.s32.totalorder %s18, 1
      %p124 = por %p122, %p123
      %p125 = scmp.ne.s32.totalorder %s117, %s120
      %p126 = scmp.eq.s32.totalorder %s18, 0
      %p127 = por %p125, %p126
      %p128 = scmp.ne.s32.totalorder %s117, %s120
      %p129 = scmp.eq.s32.totalorder %s23, 1
      %p130 = por %p128, %p129
      %p131 = scmp.ne.s32.totalorder %s120, %s121
      %p132 = scmp.eq.s32.totalorder %s23, 0
      %p133 = por %p131, %p132
      %p134 = scmp.ne.s32.totalorder %s120, %s121
      %p135 = scmp.eq.s32.totalorder %s24, 1
      %p136 = por %p134, %p135
      %p138 = scmp.ne.s32.totalorder %s121, %s137
      %p139 = scmp.eq.s32.totalorder %s24, 0
      %p140 = por %p138, %p139
      %s141 = ssub.s32 %s18, %s25
      %p142 = scmp.eq.s32.totalorder %s141, 0
      %s144 = sadd.s32 %s143, 1
      %s145 = scalar_select %p142, %s143, %s144
      %p148 = pneg %p142
      %p149 = scmp.eq.s32.totalorder %s18, 1
      %p150 = por %p148, %p149
      %p151 = scmp.ne.s32.totalorder %s143, %s146
      %p152 = scmp.eq.s32.totalorder %s18, 0
      %p153 = por %p151, %p152
      %p154 = scmp.ne.s32.totalorder %s143, %s146
      %p155 = scmp.eq.s32.totalorder %s23, 1
      %p156 = por %p154, %p155
      %p157 = scmp.ne.s32.totalorder %s146, %s147
      %p158 = scmp.eq.s32.totalorder %s23, 0
      %p159 = por %p157, %p158
      %p160 = scmp.ne.s32.totalorder %s146, %s147
      %p161 = scmp.eq.s32.totalorder %s24, 1
      %p162 = por %p160, %p161
      %p164 = scmp.ne.s32.totalorder %s147, %s163
      %p165 = scmp.eq.s32.totalorder %s24, 0
      %p166 = por %p164, %p165
      %p167 = scmp.le.s32.totalorder 1, %s18
      %p168 = scmp.lt.s32.totalorder %s18, 3
      %p169 = pnand %p167, %p168
      %p170 = pneg %p169
      // Predicated region
      $region9: #{tpu_custom_call.1} parent=5 // pred_check
        _
      $region10: #{tpu_custom_call.1} parent=5 // pred_check_branch
        %172 = sbr.rel (%p169) target = $region12
      $region11: #{tpu_custom_call.1} parent=5 // pred_region
        %s173 = ssub.s32 %s18, 1
        // Predicated region
        $region13: #{tpu_custom_call.1} parent=11 // pred_check
          %p174 = pneg %p65
        $region14: #{tpu_custom_call.1} parent=11 // pred_check_branch
          %176 = sbr.rel (%p174) target = $region16
        $region15: #{tpu_custom_call.1} parent=11 // pred_region
          _
        $region16: #{tpu_custom_call.1} parent=11 // pred_fallthru
          _
        // Predicated region
        $region17: #{tpu_custom_call.1} parent=11 // pred_check
          %p177 = pneg %p86
        $region18: #{tpu_custom_call.1} parent=11 // pred_check_branch
          %179 = sbr.rel (%p177) target = $region20
        $region19: #{tpu_custom_call.1} parent=11 // pred_region
          _
        $region20: #{tpu_custom_call.1} parent=11 // pred_fallthru
          _
        // Predicated region
        $region21: #{tpu_custom_call.1} parent=11 // pred_check
          %p180 = pneg %p107
        $region22: #{tpu_custom_call.1} parent=11 // pred_check_branch
          %182 = sbr.rel (%p180) target = $region24
        $region23: #{tpu_custom_call.1} parent=11 // pred_region
          _
        $region24: #{tpu_custom_call.1} parent=11 // pred_fallthru
          _
      $region12: #{tpu_custom_call.1} parent=5 // pred_fallthru
        _
      %p183 = scmp.lt.s32.totalorder %s18, 2
      // Predicated region
      $region25: #{tpu_custom_call.1} parent=5 // pred_check
        %p184 = pneg %p183
      $region26: #{tpu_custom_call.1} parent=5 // pred_check_branch
        %186 = sbr.rel (%p184) target = $region28
      $region27: #{tpu_custom_call.1} parent=5 // pred_region
        // Predicated region
        $region29: #{tpu_custom_call.1} parent=27 // pred_check
          %p187 = pneg %p38
        $region30: #{tpu_custom_call.1} parent=27 // pred_check_branch
          %189 = sbr.rel (%p187) target = $region32
        $region31: #{tpu_custom_call.1} parent=27 // pred_region
          %p190 = scmp.lt.s32.totalorder %s18, 1
          %s191 = scalar_select %p190, %s18, 1
          %s192 = smul.addr %s191, 32
          %s193 = smul.addr %s192, 8
          %s194 = scalar_lea.vmem %s0, %s193
        $region32: #{tpu_custom_call.1} parent=27 // pred_fallthru
          _
      $region28: #{tpu_custom_call.1} parent=5 // pred_fallthru
        _
      %p195 = scmp.le.s32.totalorder 1, %s18
      %p196 = scmp.lt.s32.totalorder %s18, 3
      %p197 = pnand %p195, %p196
      %p198 = pneg %p197
      // Predicated region
      $region33: #{tpu_custom_call.1} parent=5 // pred_check
        _
      $region34: #{tpu_custom_call.1} parent=5 // pred_check_branch
        %200 = sbr.rel (%p197) target = $region36
      $region35: #{tpu_custom_call.1} parent=5 // pred_region
        %s201 = ssub.s32 %s18, 1
        %p202 = scmp.lt.s32.totalorder %s23, 1
        %s203 = scalar_select %p202, %s23, 1
        %s204 = smul.addr %s203, 32
        %s205 = smul.addr %s204, 8
        %s206 = scalar_lea.vmem %s0, %s205
        %p207 = pneg %p44
        %p208 = pneg %p41
        %p209 = pneg %p65
        %p210 = pneg %p62
        %p211 = pneg %p86
        %p212 = pneg %p83
        %p213 = pneg %p107
        %p214 = pneg %p104
        %p215 = pneg %p133
        %p216 = pneg %p130
        %s217 = sand.u32 %s120, 1
        %s218 = scalar_lea.sflag [#allocation3], %s217
        %s219 = sand.u32 %s120, 1
        %s220 = smul.addr %s219, 16
        %s221 = scalar_lea.vmem [#allocation2], %s220
        %p222 = pneg %p159
        %p223 = pneg %p156
        %s224 = sand.u32 %s146, 1
        %s225 = scalar_lea.sflag [#allocation5], %s224
        %s226 = sand.u32 %s146, 1
        %s227 = smul.addr %s226, 8
        %s228 = scalar_lea.vmem [#allocation4], %s227
        %p229 = scmp.lt.s32.totalorder %s23, 1
        %s230 = scalar_select %p229, %s23, 1
        %s231 = smul.addr %s230, 32
        %s232 = smul.addr %s231, 8
        %s233 = scalar_lea.vmem %s0, %s232
        %v234 = vld [vmem:[%s233] sm:$0xff]
        %v235 = vld [vmem:[%s233 + $0x8] sm:$0xff]
        %v236 = vld [vmem:[%s233 + $0x10] sm:$0xff]
        %v237 = vld [vmem:[%s233 + $0x18] sm:$0xff]
        %v238 = vld [vmem:[%s233 + $0x20] sm:$0xff]
        %v239 = vld [vmem:[%s233 + $0x28] sm:$0xff]
        %v240 = vld [vmem:[%s233 + $0x30] sm:$0xff]
        %v241 = vld [vmem:[%s233 + $0x38] sm:$0xff]
        %v242 = vld [vmem:[%s233 + $0x40] sm:$0xff]
        %v243 = vld [vmem:[%s233 + $0x48] sm:$0xff]
        %v244 = vld [vmem:[%s233 + $0x50] sm:$0xff]
        %v245 = vld [vmem:[%s233 + $0x58] sm:$0xff]
        %v246 = vld [vmem:[%s233 + $0x60] sm:$0xff]
        %v247 = vld [vmem:[%s233 + $0x68] sm:$0xff]
        %v248 = vld [vmem:[%s233 + $0x70] sm:$0xff]
        %v249 = vld [vmem:[%s233 + $0x78] sm:$0xff]
        %v250 = vld [vmem:[%s233 + $0x80] sm:$0xff]
        %v251 = vld [vmem:[%s233 + $0x88] sm:$0xff]
        %v252 = vld [vmem:[%s233 + $0x90] sm:$0xff]
        %v253 = vld [vmem:[%s233 + $0x98] sm:$0xff]
        %v254 = vld [vmem:[%s233 + $0xa0] sm:$0xff]
        %v255 = vld [vmem:[%s233 + $0xa8] sm:$0xff]
        %v256 = vld [vmem:[%s233 + $0xb0] sm:$0xff]
        %v257 = vld [vmem:[%s233 + $0xb8] sm:$0xff]
        %v258 = vld [vmem:[%s233 + $0xc0] sm:$0xff]
        %v259 = vld [vmem:[%s233 + $0xc8] sm:$0xff]
        %v260 = vld [vmem:[%s233 + $0xd0] sm:$0xff]
        %v261 = vld [vmem:[%s233 + $0xd8] sm:$0xff]
        %v262 = vld [vmem:[%s233 + $0xe0] sm:$0xff]
        %v263 = vld [vmem:[%s233 + $0xe8] sm:$0xff]
        %v264 = vld [vmem:[%s233 + $0xf0] sm:$0xff]
        %v265 = vld [vmem:[%s233 + $0xf8] sm:$0xff]
        %v266 = vld [vmem:[%s1] sm:$0xf]
        %268 = vset.pattern.permute.xlu0 0
        %269 = vperm.xlu0 %268, %v234
        %v270 = vpop.permute.xlu0 %269
        %273 = vset.pattern.permute.xlu0 0
        %274 = vperm.xlu0 %273, %v235
        %v275 = vpop.permute.xlu0 %274
        %278 = vset.pattern.permute.xlu0 0
        %279 = vperm.xlu0 %278, %v236
        %v280 = vpop.permute.xlu0 %279
        %283 = vset.pattern.permute.xlu0 0
        %284 = vperm.xlu0 %283, %v237
        %v285 = vpop.permute.xlu0 %284
        %288 = vset.pattern.permute.xlu0 0
        %289 = vperm.xlu0 %288, %v238
        %v290 = vpop.permute.xlu0 %289
        %293 = vset.pattern.permute.xlu0 0
        %294 = vperm.xlu0 %293, %v239
        %v295 = vpop.permute.xlu0 %294
        %298 = vset.pattern.permute.xlu0 0
        %299 = vperm.xlu0 %298, %v240
        %v300 = vpop.permute.xlu0 %299
        %303 = vset.pattern.permute.xlu0 0
        %304 = vperm.xlu0 %303, %v241
        %v305 = vpop.permute.xlu0 %304
        %308 = vset.pattern.permute.xlu0 0
        %309 = vperm.xlu0 %308, %v242
        %v310 = vpop.permute.xlu0 %309
        %313 = vset.pattern.permute.xlu0 0
        %314 = vperm.xlu0 %313, %v243
        %v315 = vpop.permute.xlu0 %314
        %318 = vset.pattern.permute.xlu0 0
        %319 = vperm.xlu0 %318, %v244
        %v320 = vpop.permute.xlu0 %319
        %323 = vset.pattern.permute.xlu0 0
        %324 = vperm.xlu0 %323, %v245
        %v325 = vpop.permute.xlu0 %324
        %328 = vset.pattern.permute.xlu0 0
        %329 = vperm.xlu0 %328, %v246
        %v330 = vpop.permute.xlu0 %329
        %333 = vset.pattern.permute.xlu0 0
        %334 = vperm.xlu0 %333, %v247
        %v335 = vpop.permute.xlu0 %334
        %338 = vset.pattern.permute.xlu0 0
        %339 = vperm.xlu0 %338, %v248
        %v340 = vpop.permute.xlu0 %339
        %343 = vset.pattern.permute.xlu0 0
        %344 = vperm.xlu0 %343, %v249
        %v345 = vpop.permute.xlu0 %344
        %348 = vset.pattern.permute.xlu0 0
        %349 = vperm.xlu0 %348, %v250
        %v350 = vpop.permute.xlu0 %349
        %353 = vset.pattern.permute.xlu0 0
        %354 = vperm.xlu0 %353, %v251
        %v355 = vpop.permute.xlu0 %354
        %358 = vset.pattern.permute.xlu0 0
        %359 = vperm.xlu0 %358, %v252
        %v360 = vpop.permute.xlu0 %359
        %363 = vset.pattern.permute.xlu0 0
        %364 = vperm.xlu0 %363, %v253
        %v365 = vpop.permute.xlu0 %364
        %368 = vset.pattern.permute.xlu0 0
        %369 = vperm.xlu0 %368, %v254
        %v370 = vpop.permute.xlu0 %369
        %373 = vset.pattern.permute.xlu0 0
        %374 = vperm.xlu0 %373, %v255
        %v375 = vpop.permute.xlu0 %374
        %378 = vset.pattern.permute.xlu0 0
        %379 = vperm.xlu0 %378, %v256
        %v380 = vpop.permute.xlu0 %379
        %383 = vset.pattern.permute.xlu0 0
        %384 = vperm.xlu0 %383, %v257
        %v385 = vpop.permute.xlu0 %384
        %388 = vset.pattern.permute.xlu0 0
        %389 = vperm.xlu0 %388, %v258
        %v390 = vpop.permute.xlu0 %389
        %393 = vset.pattern.permute.xlu0 0
        %394 = vperm.xlu0 %393, %v259
        %v395 = vpop.permute.xlu0 %394
        %398 = vset.pattern.permute.xlu0 0
        %399 = vperm.xlu0 %398, %v260
        %v400 = vpop.permute.xlu0 %399
        %403 = vset.pattern.permute.xlu0 0
        %404 = vperm.xlu0 %403, %v261
        %v405 = vpop.permute.xlu0 %404
        %408 = vset.pattern.permute.xlu0 0
        %409 = vperm.xlu0 %408, %v262
        %v410 = vpop.permute.xlu0 %409
        %413 = vset.pattern.permute.xlu0 0
        %414 = vperm.xlu0 %413, %v263
        %v415 = vpop.permute.xlu0 %414
        %418 = vset.pattern.permute.xlu0 0
        %419 = vperm.xlu0 %418, %v264
        %v420 = vpop.permute.xlu0 %419
        %423 = vset.pattern.permute.xlu0 0
        %424 = vperm.xlu0 %423, %v265
        %v425 = vpop.permute.xlu0 %424
        %v427 = vlaneseq
        %v428 = vshrl.u32 %v427, 7
        %v429 = vsub.s32 0, %v428
        %v430 = vrot.slane %v266, %v429
        %v431 = vmul.f32 %v270, %v430
        %v432 = vmul.f32 %v275, %v430
        %v433 = vmul.f32 %v280, %v430
        %v434 = vmul.f32 %v285, %v430
        %v435 = vmul.f32 %v290, %v430
        %v436 = vmul.f32 %v295, %v430
        %v437 = vmul.f32 %v300, %v430
        %v438 = vmul.f32 %v305, %v430
        %v439 = vmul.f32 %v310, %v430
        %v440 = vmul.f32 %v315, %v430
        %v441 = vmul.f32 %v320, %v430
        %v442 = vmul.f32 %v325, %v430
        %v443 = vmul.f32 %v330, %v430
        %v444 = vmul.f32 %v335, %v430
        %v445 = vmul.f32 %v340, %v430
        %v446 = vmul.f32 %v345, %v430
        %v447 = vmul.f32 %v350, %v430
        %v448 = vmul.f32 %v355, %v430
        %v449 = vmul.f32 %v360, %v430
        %v450 = vmul.f32 %v365, %v430
        %v451 = vmul.f32 %v370, %v430
        %v452 = vmul.f32 %v375, %v430
        %v453 = vmul.f32 %v380, %v430
        %v454 = vmul.f32 %v385, %v430
        %v455 = vmul.f32 %v390, %v430
        %v456 = vmul.f32 %v395, %v430
        %v457 = vmul.f32 %v400, %v430
        %v458 = vmul.f32 %v405, %v430
        %v459 = vmul.f32 %v410, %v430
        %v460 = vmul.f32 %v415, %v430
        %v461 = vmul.f32 %v420, %v430
        %v462 = vmul.f32 %v425, %v430
        %463 = vset.pattern.permute.xlu0 1
        %464 = vperm.xlu0 %463, %v234
        %v465 = vpop.permute.xlu0 %464
        %467 = vset.pattern.permute.xlu0 1
        %468 = vperm.xlu0 %467, %v235
        %v469 = vpop.permute.xlu0 %468
        %471 = vset.pattern.permute.xlu0 1
        %472 = vperm.xlu0 %471, %v236
        %v473 = vpop.permute.xlu0 %472
        %475 = vset.pattern.permute.xlu0 1
        %476 = vperm.xlu0 %475, %v237
        %v477 = vpop.permute.xlu0 %476
        %479 = vset.pattern.permute.xlu0 1
        %480 = vperm.xlu0 %479, %v238
        %v481 = vpop.permute.xlu0 %480
        %483 = vset.pattern.permute.xlu0 1
        %484 = vperm.xlu0 %483, %v239
        %v485 = vpop.permute.xlu0 %484
        %487 = vset.pattern.permute.xlu0 1
        %488 = vperm.xlu0 %487, %v240
        %v489 = vpop.permute.xlu0 %488
        %491 = vset.pattern.permute.xlu0 1
        %492 = vperm.xlu0 %491, %v241
        %v493 = vpop.permute.xlu0 %492
        %495 = vset.pattern.permute.xlu0 1
        %496 = vperm.xlu0 %495, %v242
        %v497 = vpop.permute.xlu0 %496
        %499 = vset.pattern.permute.xlu0 1
        %500 = vperm.xlu0 %499, %v243
        %v501 = vpop.permute.xlu0 %500
        %503 = vset.pattern.permute.xlu0 1
        %504 = vperm.xlu0 %503, %v244
        %v505 = vpop.permute.xlu0 %504
        %507 = vset.pattern.permute.xlu0 1
        %508 = vperm.xlu0 %507, %v245
        %v509 = vpop.permute.xlu0 %508
        %511 = vset.pattern.permute.xlu0 1
        %512 = vperm.xlu0 %511, %v246
        %v513 = vpop.permute.xlu0 %512
        %515 = vset.pattern.permute.xlu0 1
        %516 = vperm.xlu0 %515, %v247
        %v517 = vpop.permute.xlu0 %516
        %519 = vset.pattern.permute.xlu0 1
        %520 = vperm.xlu0 %519, %v248
        %v521 = vpop.permute.xlu0 %520
        %523 = vset.pattern.permute.xlu0 1
        %524 = vperm.xlu0 %523, %v249
        %v525 = vpop.permute.xlu0 %524
        %527 = vset.pattern.permute.xlu0 1
        %528 = vperm.xlu0 %527, %v250
        %v529 = vpop.permute.xlu0 %528
        %531 = vset.pattern.permute.xlu0 1
        %532 = vperm.xlu0 %531, %v251
        %v533 = vpop.permute.xlu0 %532
        %535 = vset.pattern.permute.xlu0 1
        %536 = vperm.xlu0 %535, %v252
        %v537 = vpop.permute.xlu0 %536
        %539 = vset.pattern.permute.xlu0 1
        %540 = vperm.xlu0 %539, %v253
        %v541 = vpop.permute.xlu0 %540
        %543 = vset.pattern.permute.xlu0 1
        %544 = vperm.xlu0 %543, %v254
        %v545 = vpop.permute.xlu0 %544
        %547 = vset.pattern.permute.xlu0 1
        %548 = vperm.xlu0 %547, %v255
        %v549 = vpop.permute.xlu0 %548
        %551 = vset.pattern.permute.xlu0 1
        %552 = vperm.xlu0 %551, %v256
        %v553 = vpop.permute.xlu0 %552
        %555 = vset.pattern.permute.xlu0 1
        %556 = vperm.xlu0 %555, %v257
        %v557 = vpop.permute.xlu0 %556
        %559 = vset.pattern.permute.xlu0 1
        %560 = vperm.xlu0 %559, %v258
        %v561 = vpop.permute.xlu0 %560
        %563 = vset.pattern.permute.xlu0 1
        %564 = vperm.xlu0 %563, %v259
        %v565 = vpop.permute.xlu0 %564
        %567 = vset.pattern.permute.xlu0 1
        %568 = vperm.xlu0 %567, %v260
        %v569 = vpop.permute.xlu0 %568
        %571 = vset.pattern.permute.xlu0 1
        %572 = vperm.xlu0 %571, %v261
        %v573 = vpop.permute.xlu0 %572
        %575 = vset.pattern.permute.xlu0 1
        %576 = vperm.xlu0 %575, %v262
        %v577 = vpop.permute.xlu0 %576
        %579 = vset.pattern.permute.xlu0 1
        %580 = vperm.xlu0 %579, %v263
        %v581 = vpop.permute.xlu0 %580
        %583 = vset.pattern.permute.xlu0 1
        %584 = vperm.xlu0 %583, %v264
        %v585 = vpop.permute.xlu0 %584
        %587 = vset.pattern.permute.xlu0 1
        %588 = vperm.xlu0 %587, %v265
        %v589 = vpop.permute.xlu0 %588
        %v591 = vlaneseq
        %v592 = vshrl.u32 %v591, 7
        %v593 = vsub.s32 1, %v592
        %v594 = vrot.slane %v266, %v593
        %v595 = vmul.f32 %v465, %v594
        %v596 = vmul.f32 %v469, %v594
        %v597 = vmul.f32 %v473, %v594
        %v598 = vmul.f32 %v477, %v594
        %v599 = vmul.f32 %v481, %v594
        %v600 = vmul.f32 %v485, %v594
        %v601 = vmul.f32 %v489, %v594
        %v602 = vmul.f32 %v493, %v594
        %v603 = vmul.f32 %v497, %v594
        %v604 = vmul.f32 %v501, %v594
        %v605 = vmul.f32 %v505, %v594
        %v606 = vmul.f32 %v509, %v594
        %v607 = vmul.f32 %v513, %v594
        %v608 = vmul.f32 %v517, %v594
        %v609 = vmul.f32 %v521, %v594
        %v610 = vmul.f32 %v525, %v594
        %v611 = vmul.f32 %v529, %v594
        %v612 = vmul.f32 %v533, %v594
        %v613 = vmul.f32 %v537, %v594
        %v614 = vmul.f32 %v541, %v594
        %v615 = vmul.f32 %v545, %v594
        %v616 = vmul.f32 %v549, %v594
        %v617 = vmul.f32 %v553, %v594
        %v618 = vmul.f32 %v557, %v594
        %v619 = vmul.f32 %v561, %v594
        %v620 = vmul.f32 %v565, %v594
        %v621 = vmul.f32 %v569, %v594
        %v622 = vmul.f32 %v573, %v594
        %v623 = vmul.f32 %v577, %v594
        %v624 = vmul.f32 %v581, %v594
        %v625 = vmul.f32 %v585, %v594
        %v626 = vmul.f32 %v589, %v594
        %v627 = vadd.f32 %v431, %v595
        %v628 = vadd.f32 %v432, %v596
        %v629 = vadd.f32 %v433, %v597
        %v630 = vadd.f32 %v434, %v598
        %v631 = vadd.f32 %v435, %v599
        %v632 = vadd.f32 %v436, %v600
        %v633 = vadd.f32 %v437, %v601
        %v634 = vadd.f32 %v438, %v602
        %v635 = vadd.f32 %v439, %v603
        %v636 = vadd.f32 %v440, %v604
        %v637 = vadd.f32 %v441, %v605
        %v638 = vadd.f32 %v442, %v606
        %v639 = vadd.f32 %v443, %v607
        %v640 = vadd.f32 %v444, %v608
        %v641 = vadd.f32 %v445, %v609
        %v642 = vadd.f32 %v446, %v610
        %v643 = vadd.f32 %v447, %v611
        %v644 = vadd.f32 %v448, %v612
        %v645 = vadd.f32 %v449, %v613
        %v646 = vadd.f32 %v450, %v614
        %v647 = vadd.f32 %v451, %v615
        %v648 = vadd.f32 %v452, %v616
        %v649 = vadd.f32 %v453, %v617
        %v650 = vadd.f32 %v454, %v618
        %v651 = vadd.f32 %v455, %v619
        %v652 = vadd.f32 %v456, %v620
        %v653 = vadd.f32 %v457, %v621
        %v654 = vadd.f32 %v458, %v622
        %v655 = vadd.f32 %v459, %v623
        %v656 = vadd.f32 %v460, %v624
        %v657 = vadd.f32 %v461, %v625
        %v658 = vadd.f32 %v462, %v626
        %659 = vset.pattern.permute.xlu0 2
        %660 = vperm.xlu0 %659, %v234
        %v661 = vpop.permute.xlu0 %660
        %663 = vset.pattern.permute.xlu0 2
        %664 = vperm.xlu0 %663, %v235
        %v665 = vpop.permute.xlu0 %664
        %667 = vset.pattern.permute.xlu0 2
        %668 = vperm.xlu0 %667, %v236
        %v669 = vpop.permute.xlu0 %668
        %671 = vset.pattern.permute.xlu0 2
        %672 = vperm.xlu0 %671, %v237
        %v673 = vpop.permute.xlu0 %672
        %675 = vset.pattern.permute.xlu0 2
        %676 = vperm.xlu0 %675, %v238
        %v677 = vpop.permute.xlu0 %676
        %679 = vset.pattern.permute.xlu0 2
        %680 = vperm.xlu0 %679, %v239
        %v681 = vpop.permute.xlu0 %680
        %683 = vset.pattern.permute.xlu0 2
        %684 = vperm.xlu0 %683, %v240
        %v685 = vpop.permute.xlu0 %684
        %687 = vset.pattern.permute.xlu0 2
        %688 = vperm.xlu0 %687, %v241
        %v689 = vpop.permute.xlu0 %688
        %691 = vset.pattern.permute.xlu0 2
        %692 = vperm.xlu0 %691, %v242
        %v693 = vpop.permute.xlu0 %692
        %695 = vset.pattern.permute.xlu0 2
        %696 = vperm.xlu0 %695, %v243
        %v697 = vpop.permute.xlu0 %696
        %699 = vset.pattern.permute.xlu0 2
        %700 = vperm.xlu0 %699, %v244
        %v701 = vpop.permute.xlu0 %700
        %703 = vset.pattern.permute.xlu0 2
        %704 = vperm.xlu0 %703, %v245
        %v705 = vpop.permute.xlu0 %704
        %707 = vset.pattern.permute.xlu0 2
        %708 = vperm.xlu0 %707, %v246
        %v709 = vpop.permute.xlu0 %708
        %711 = vset.pattern.permute.xlu0 2
        %712 = vperm.xlu0 %711, %v247
        %v713 = vpop.permute.xlu0 %712
        %715 = vset.pattern.permute.xlu0 2
        %716 = vperm.xlu0 %715, %v248
        %v717 = vpop.permute.xlu0 %716
        %719 = vset.pattern.permute.xlu0 2
        %720 = vperm.xlu0 %719, %v249
        %v721 = vpop.permute.xlu0 %720
        %723 = vset.pattern.permute.xlu0 2
        %724 = vperm.xlu0 %723, %v250
        %v725 = vpop.permute.xlu0 %724
        %727 = vset.pattern.permute.xlu0 2
        %728 = vperm.xlu0 %727, %v251
        %v729 = vpop.permute.xlu0 %728
        %731 = vset.pattern.permute.xlu0 2
        %732 = vperm.xlu0 %731, %v252
        %v733 = vpop.permute.xlu0 %732
        %735 = vset.pattern.permute.xlu0 2
        %736 = vperm.xlu0 %735, %v253
        %v737 = vpop.permute.xlu0 %736
        %739 = vset.pattern.permute.xlu0 2
        %740 = vperm.xlu0 %739, %v254
        %v741 = vpop.permute.xlu0 %740
        %743 = vset.pattern.permute.xlu0 2
        %744 = vperm.xlu0 %743, %v255
        %v745 = vpop.permute.xlu0 %744
        %747 = vset.pattern.permute.xlu0 2
        %748 = vperm.xlu0 %747, %v256
        %v749 = vpop.permute.xlu0 %748
        %751 = vset.pattern.permute.xlu0 2
        %752 = vperm.xlu0 %751, %v257
        %v753 = vpop.permute.xlu0 %752
        %755 = vset.pattern.permute.xlu0 2
        %756 = vperm.xlu0 %755, %v258
        %v757 = vpop.permute.xlu0 %756
        %759 = vset.pattern.permute.xlu0 2
        %760 = vperm.xlu0 %759, %v259
        %v761 = vpop.permute.xlu0 %760
        %763 = vset.pattern.permute.xlu0 2
        %764 = vperm.xlu0 %763, %v260
        %v765 = vpop.permute.xlu0 %764
        %767 = vset.pattern.permute.xlu0 2
        %768 = vperm.xlu0 %767, %v261
        %v769 = vpop.permute.xlu0 %768
        %771 = vset.pattern.permute.xlu0 2
        %772 = vperm.xlu0 %771, %v262
        %v773 = vpop.permute.xlu0 %772
        %775 = vset.pattern.permute.xlu0 2
        %776 = vperm.xlu0 %775, %v263
        %v777 = vpop.permute.xlu0 %776
        %779 = vset.pattern.permute.xlu0 2
        %780 = vperm.xlu0 %779, %v264
        %v781 = vpop.permute.xlu0 %780
        %783 = vset.pattern.permute.xlu0 2
        %784 = vperm.xlu0 %783, %v265
        %v785 = vpop.permute.xlu0 %784
        %v787 = vlaneseq
        %v788 = vshrl.u32 %v787, 7
        %v789 = vsub.s32 2, %v788
        %v790 = vrot.slane %v266, %v789
        %v791 = vmul.f32 %v661, %v790
        %v792 = vmul.f32 %v665, %v790
        %v793 = vmul.f32 %v669, %v790
        %v794 = vmul.f32 %v673, %v790
        %v795 = vmul.f32 %v677, %v790
        %v796 = vmul.f32 %v681, %v790
        %v797 = vmul.f32 %v685, %v790
        %v798 = vmul.f32 %v689, %v790
        %v799 = vmul.f32 %v693, %v790
        %v800 = vmul.f32 %v697, %v790
        %v801 = vmul.f32 %v701, %v790
        %v802 = vmul.f32 %v705, %v790
        %v803 = vmul.f32 %v709, %v790
        %v804 = vmul.f32 %v713, %v790
        %v805 = vmul.f32 %v717, %v790
        %v806 = vmul.f32 %v721, %v790
        %v807 = vmul.f32 %v725, %v790
        %v808 = vmul.f32 %v729, %v790
        %v809 = vmul.f32 %v733, %v790
        %v810 = vmul.f32 %v737, %v790
        %v811 = vmul.f32 %v741, %v790
        %v812 = vmul.f32 %v745, %v790
        %v813 = vmul.f32 %v749, %v790
        %v814 = vmul.f32 %v753, %v790
        %v815 = vmul.f32 %v757, %v790
        %v816 = vmul.f32 %v761, %v790
        %v817 = vmul.f32 %v765, %v790
        %v818 = vmul.f32 %v769, %v790
        %v819 = vmul.f32 %v773, %v790
        %v820 = vmul.f32 %v777, %v790
        %v821 = vmul.f32 %v781, %v790
        %v822 = vmul.f32 %v785, %v790
        %v823 = vadd.f32 %v627, %v791
        %v824 = vadd.f32 %v628, %v792
        %v825 = vadd.f32 %v629, %v793
        %v826 = vadd.f32 %v630, %v794
        %v827 = vadd.f32 %v631, %v795
        %v828 = vadd.f32 %v632, %v796
        %v829 = vadd.f32 %v633, %v797
        %v830 = vadd.f32 %v634, %v798
        %v831 = vadd.f32 %v635, %v799
        %v832 = vadd.f32 %v636, %v800
        %v833 = vadd.f32 %v637, %v801
        %v834 = vadd.f32 %v638, %v802
        %v835 = vadd.f32 %v639, %v803
        %v836 = vadd.f32 %v640, %v804
        %v837 = vadd.f32 %v641, %v805
        %v838 = vadd.f32 %v642, %v806
        %v839 = vadd.f32 %v643, %v807
        %v840 = vadd.f32 %v644, %v808
        %v841 = vadd.f32 %v645, %v809
        %v842 = vadd.f32 %v646, %v810
        %v843 = vadd.f32 %v647, %v811
        %v844 = vadd.f32 %v648, %v812
        %v845 = vadd.f32 %v649, %v813
        %v846 = vadd.f32 %v650, %v814
        %v847 = vadd.f32 %v651, %v815
        %v848 = vadd.f32 %v652, %v816
        %v849 = vadd.f32 %v653, %v817
        %v850 = vadd.f32 %v654, %v818
        %v851 = vadd.f32 %v655, %v819
        %v852 = vadd.f32 %v656, %v820
        %v853 = vadd.f32 %v657, %v821
        %v854 = vadd.f32 %v658, %v822
        %855 = vset.pattern.permute.xlu0 3
        %856 = vperm.xlu0 %855, %v234
        %v857 = vpop.permute.xlu0 %856
        %859 = vset.pattern.permute.xlu0 3
        %860 = vperm.xlu0 %859, %v235
        %v861 = vpop.permute.xlu0 %860
        %863 = vset.pattern.permute.xlu0 3
        %864 = vperm.xlu0 %863, %v236
        %v865 = vpop.permute.xlu0 %864
        %867 = vset.pattern.permute.xlu0 3
        %868 = vperm.xlu0 %867, %v237
        %v869 = vpop.permute.xlu0 %868
        %871 = vset.pattern.permute.xlu0 3
        %872 = vperm.xlu0 %871, %v238
        %v873 = vpop.permute.xlu0 %872
        %875 = vset.pattern.permute.xlu0 3
        %876 = vperm.xlu0 %875, %v239
        %v877 = vpop.permute.xlu0 %876
        %879 = vset.pattern.permute.xlu0 3
        %880 = vperm.xlu0 %879, %v240
        %v881 = vpop.permute.xlu0 %880
        %883 = vset.pattern.permute.xlu0 3
        %884 = vperm.xlu0 %883, %v241
        %v885 = vpop.permute.xlu0 %884
        %887 = vset.pattern.permute.xlu0 3
        %888 = vperm.xlu0 %887, %v242
        %v889 = vpop.permute.xlu0 %888
        %891 = vset.pattern.permute.xlu0 3
        %892 = vperm.xlu0 %891, %v243
        %v893 = vpop.permute.xlu0 %892
        %895 = vset.pattern.permute.xlu0 3
        %896 = vperm.xlu0 %895, %v244
        %v897 = vpop.permute.xlu0 %896
        %899 = vset.pattern.permute.xlu0 3
        %900 = vperm.xlu0 %899, %v245
        %v901 = vpop.permute.xlu0 %900
        %903 = vset.pattern.permute.xlu0 3
        %904 = vperm.xlu0 %903, %v246
        %v905 = vpop.permute.xlu0 %904
        %907 = vset.pattern.permute.xlu0 3
        %908 = vperm.xlu0 %907, %v247
        %v909 = vpop.permute.xlu0 %908
        %911 = vset.pattern.permute.xlu0 3
        %912 = vperm.xlu0 %911, %v248
        %v913 = vpop.permute.xlu0 %912
        %915 = vset.pattern.permute.xlu0 3
        %916 = vperm.xlu0 %915, %v249
        %v917 = vpop.permute.xlu0 %916
        %919 = vset.pattern.permute.xlu0 3
        %920 = vperm.xlu0 %919, %v250
        %v921 = vpop.permute.xlu0 %920
        %923 = vset.pattern.permute.xlu0 3
        %924 = vperm.xlu0 %923, %v251
        %v925 = vpop.permute.xlu0 %924
        %927 = vset.pattern.permute.xlu0 3
        %928 = vperm.xlu0 %927, %v252
        %v929 = vpop.permute.xlu0 %928
        %931 = vset.pattern.permute.xlu0 3
        %932 = vperm.xlu0 %931, %v253
        %v933 = vpop.permute.xlu0 %932
        %935 = vset.pattern.permute.xlu0 3
        %936 = vperm.xlu0 %935, %v254
        %v937 = vpop.permute.xlu0 %936
        %939 = vset.pattern.permute.xlu0 3
        %940 = vperm.xlu0 %939, %v255
        %v941 = vpop.permute.xlu0 %940
        %943 = vset.pattern.permute.xlu0 3
        %944 = vperm.xlu0 %943, %v256
        %v945 = vpop.permute.xlu0 %944
        %947 = vset.pattern.permute.xlu0 3
        %948 = vperm.xlu0 %947, %v257
        %v949 = vpop.permute.xlu0 %948
        %951 = vset.pattern.permute.xlu0 3
        %952 = vperm.xlu0 %951, %v258
        %v953 = vpop.permute.xlu0 %952
        %955 = vset.pattern.permute.xlu0 3
        %956 = vperm.xlu0 %955, %v259
        %v957 = vpop.permute.xlu0 %956
        %959 = vset.pattern.permute.xlu0 3
        %960 = vperm.xlu0 %959, %v260
        %v961 = vpop.permute.xlu0 %960
        %963 = vset.pattern.permute.xlu0 3
        %964 = vperm.xlu0 %963, %v261
        %v965 = vpop.permute.xlu0 %964
        %967 = vset.pattern.permute.xlu0 3
        %968 = vperm.xlu0 %967, %v262
        %v969 = vpop.permute.xlu0 %968
        %971 = vset.pattern.permute.xlu0 3
        %972 = vperm.xlu0 %971, %v263
        %v973 = vpop.permute.xlu0 %972
        %975 = vset.pattern.permute.xlu0 3
        %976 = vperm.xlu0 %975, %v264
        %v977 = vpop.permute.xlu0 %976
        %979 = vset.pattern.permute.xlu0 3
        %980 = vperm.xlu0 %979, %v265
        %v981 = vpop.permute.xlu0 %980
        %v983 = vlaneseq
        %v984 = vshrl.u32 %v983, 7
        %v985 = vsub.s32 3, %v984
        %v986 = vrot.slane %v266, %v985
        %v987 = vmul.f32 %v857, %v986
        %v988 = vmul.f32 %v861, %v986
        %v989 = vmul.f32 %v865, %v986
        %v990 = vmul.f32 %v869, %v986
        %v991 = vmul.f32 %v873, %v986
        %v992 = vmul.f32 %v877, %v986
        %v993 = vmul.f32 %v881, %v986
        %v994 = vmul.f32 %v885, %v986
        %v995 = vmul.f32 %v889, %v986
        %v996 = vmul.f32 %v893, %v986
        %v997 = vmul.f32 %v897, %v986
        %v998 = vmul.f32 %v901, %v986
        %v999 = vmul.f32 %v905, %v986
        %v1000 = vmul.f32 %v909, %v986
        %v1001 = vmul.f32 %v913, %v986
        %v1002 = vmul.f32 %v917, %v986
        %v1003 = vmul.f32 %v921, %v986
        %v1004 = vmul.f32 %v925, %v986
        %v1005 = vmul.f32 %v929, %v986
        %v1006 = vmul.f32 %v933, %v986
        %v1007 = vmul.f32 %v937, %v986
        %v1008 = vmul.f32 %v941, %v986
        %v1009 = vmul.f32 %v945, %v986
        %v1010 = vmul.f32 %v949, %v986
        %v1011 = vmul.f32 %v953, %v986
        %v1012 = vmul.f32 %v957, %v986
        %v1013 = vmul.f32 %v961, %v986
        %v1014 = vmul.f32 %v965, %v986
        %v1015 = vmul.f32 %v969, %v986
        %v1016 = vmul.f32 %v973, %v986
        %v1017 = vmul.f32 %v977, %v986
        %v1018 = vmul.f32 %v981, %v986
        %v1019 = vadd.f32 %v823, %v987
        %v1020 = vadd.f32 %v824, %v988
        %v1021 = vadd.f32 %v825, %v989
        %v1022 = vadd.f32 %v826, %v990
        %v1023 = vadd.f32 %v827, %v991
        %v1024 = vadd.f32 %v828, %v992
        %v1025 = vadd.f32 %v829, %v993
        %v1026 = vadd.f32 %v830, %v994
        %v1027 = vadd.f32 %v831, %v995
        %v1028 = vadd.f32 %v832, %v996
        %v1029 = vadd.f32 %v833, %v997
        %v1030 = vadd.f32 %v834, %v998
        %v1031 = vadd.f32 %v835, %v999
        %v1032 = vadd.f32 %v836, %v1000
        %v1033 = vadd.f32 %v837, %v1001
        %v1034 = vadd.f32 %v838, %v1002
        %v1035 = vadd.f32 %v839, %v1003
        %v1036 = vadd.f32 %v840, %v1004
        %v1037 = vadd.f32 %v841, %v1005
        %v1038 = vadd.f32 %v842, %v1006
        %v1039 = vadd.f32 %v843, %v1007
        %v1040 = vadd.f32 %v844, %v1008
        %v1041 = vadd.f32 %v845, %v1009
        %v1042 = vadd.f32 %v846, %v1010
        %v1043 = vadd.f32 %v847, %v1011
        %v1044 = vadd.f32 %v848, %v1012
        %v1045 = vadd.f32 %v849, %v1013
        %v1046 = vadd.f32 %v850, %v1014
        %v1047 = vadd.f32 %v851, %v1015
        %v1048 = vadd.f32 %v852, %v1016
        %v1049 = vadd.f32 %v853, %v1017
        %v1050 = vadd.f32 %v854, %v1018
        %v1051 = vmax.f32 %v1019, 0.0
        %v1052 = vmax.f32 %v1020, 0.0
        %v1053 = vmax.f32 %v1021, 0.0
        %v1054 = vmax.f32 %v1022, 0.0
        %v1055 = vmax.f32 %v1023, 0.0
        %v1056 = vmax.f32 %v1024, 0.0
        %v1057 = vmax.f32 %v1025, 0.0
        %v1058 = vmax.f32 %v1026, 0.0
        %v1059 = vmax.f32 %v1027, 0.0
        %v1060 = vmax.f32 %v1028, 0.0
        %v1061 = vmax.f32 %v1029, 0.0
        %v1062 = vmax.f32 %v1030, 0.0
        %v1063 = vmax.f32 %v1031, 0.0
        %v1064 = vmax.f32 %v1032, 0.0
        %v1065 = vmax.f32 %v1033, 0.0
        %v1066 = vmax.f32 %v1034, 0.0
        %v1067 = vmax.f32 %v1035, 0.0
        %v1068 = vmax.f32 %v1036, 0.0
        %v1069 = vmax.f32 %v1037, 0.0
        %v1070 = vmax.f32 %v1038, 0.0
        %v1071 = vmax.f32 %v1039, 0.0
        %v1072 = vmax.f32 %v1040, 0.0
        %v1073 = vmax.f32 %v1041, 0.0
        %v1074 = vmax.f32 %v1042, 0.0
        %v1075 = vmax.f32 %v1043, 0.0
        %v1076 = vmax.f32 %v1044, 0.0
        %v1077 = vmax.f32 %v1045, 0.0
        %v1078 = vmax.f32 %v1046, 0.0
        %v1079 = vmax.f32 %v1047, 0.0
        %v1080 = vmax.f32 %v1048, 0.0
        %v1081 = vmax.f32 %v1049, 0.0
        %v1082 = vmax.f32 %v1050, 0.0
        %v1083 = vld [vmem:[%s2] sm:$0xff]
        %v1084 = vld [vmem:[%s2 + $0x8] sm:$0xff]
        %1085 = vmatprep.subr.mxu0 0.0
        %1086 = vmatpush1.msra.mxu0 %v1066
        %1087 = vmatprep.subr.mxu0 0.0
        %1088 = vmatpush1.msra.mxu0 %v1065
        %1089 = vmatprep.subr.mxu0 0.0
        %1090 = vmatpush1.msra.mxu0 %v1064
        %1091 = vmatprep.subr.mxu0 0.0
        %1092 = vmatpush1.msra.mxu0 %v1063
        %1093 = vmatprep.subr.mxu0 0.0
        %1094 = vmatpush1.msra.mxu0 %v1062
        %1095 = vmatprep.subr.mxu0 0.0
        %1096 = vmatpush1.msra.mxu0 %v1061
        %1097 = vmatprep.subr.mxu0 0.0
        %1098 = vmatpush1.msra.mxu0 %v1060
        %1099 = vmatprep.subr.mxu0 0.0
        %1100 = vmatpush1.msra.mxu0 %v1059
        %1101 = vmatprep.subr.mxu0 0.0
        %1102 = vmatpush1.msra.mxu0 %v1058
        %1103 = vmatprep.subr.mxu0 0.0
        %1104 = vmatpush1.msra.mxu0 %v1057
        %1105 = vmatprep.subr.mxu0 0.0
        %1106 = vmatpush1.msra.mxu0 %v1056
        %1107 = vmatprep.subr.mxu0 0.0
        %1108 = vmatpush1.msra.mxu0 %v1055
        %1109 = vmatprep.subr.mxu0 0.0
        %1110 = vmatpush1.msra.mxu0 %v1054
        %1111 = vmatprep.subr.mxu0 0.0
        %1112 = vmatpush1.msra.mxu0 %v1053
        %1113 = vmatprep.subr.mxu0 0.0
        %1114 = vmatpush1.msra.mxu0 %v1052
        %1115 = vmatprep.subr.mxu0 0.0
        %1116 = vmatpush1.msra.mxu0 %v1051
        %1117 = vmatprep.subr.mxu0 0.0
        %1118 = vmatpush2.msra.mxu0 %v1082
        %1119 = vmatprep.subr.mxu0 0.0
        %1120 = vmatpush2.msra.mxu0 %v1081
        %1121 = vmatprep.subr.mxu0 0.0
        %1122 = vmatpush2.msra.mxu0 %v1080
        %1123 = vmatprep.subr.mxu0 0.0
        %1124 = vmatpush2.msra.mxu0 %v1079
        %1125 = vmatprep.subr.mxu0 0.0
        %1126 = vmatpush2.msra.mxu0 %v1078
        %1127 = vmatprep.subr.mxu0 0.0
        %1128 = vmatpush2.msra.mxu0 %v1077
        %1129 = vmatprep.subr.mxu0 0.0
        %1130 = vmatpush2.msra.mxu0 %v1076
        %1131 = vmatprep.subr.mxu0 0.0
        %1132 = vmatpush2.msra.mxu0 %v1075
        %1133 = vmatprep.subr.mxu0 0.0
        %1134 = vmatpush2.msra.mxu0 %v1074
        %1135 = vmatprep.subr.mxu0 0.0
        %1136 = vmatpush2.msra.mxu0 %v1073
        %1137 = vmatprep.subr.mxu0 0.0
        %1138 = vmatpush2.msra.mxu0 %v1072
        %1139 = vmatprep.subr.mxu0 0.0
        %1140 = vmatpush2.msra.mxu0 %v1071
        %1141 = vmatprep.subr.mxu0 0.0
        %1142 = vmatpush2.msra.mxu0 %v1070
        %1143 = vmatprep.subr.mxu0 0.0
        %1144 = vmatpush2.msra.mxu0 %v1069
        %1145 = vmatprep.subr.mxu0 0.0
        %1146 = vmatpush2.msra.mxu0 %v1068
        %1147 = vmatprep.subr.mxu0 0.0
        %1148 = vmatpush2.msra.mxu0 %v1067
        %1149 = vmatprep.mubr.f32.mxu0 %v1084
        %1150 = vmatmul.mubr.f32.gmra.mxu0 %v1083
        %v1151 = vpop.f32.mrf.mxu0
        %v1152 = vadd.f32 0.0, %v1151
        %v1153 = vpop.f32.mrf.mxu0
        %1154 = vdwg.mxu0
        %v1155 = vld [vmem:[%s3] sm:$0xff]
        %v1156 = vld [vmem:[%s3 + $0x8] sm:$0xff]
        %v1157 = vld [vmem:[%s3 + $0x10] sm:$0xff]
        %v1158 = vld [vmem:[%s3 + $0x18] sm:$0xff]
        %v1159 = vld [vmem:[%s3 + $0x20] sm:$0xff]
        %v1160 = vld [vmem:[%s3 + $0x28] sm:$0xff]
        %v1161 = vld [vmem:[%s3 + $0x30] sm:$0xff]
        %v1162 = vld [vmem:[%s3 + $0x38] sm:$0xff]
        %v1163 = vld [vmem:[%s3 + $0x40] sm:$0xff]
        %v1164 = vld [vmem:[%s3 + $0x48] sm:$0xff]
        %v1165 = vld [vmem:[%s3 + $0x50] sm:$0xff]
        %v1166 = vld [vmem:[%s3 + $0x58] sm:$0xff]
        %vm1167 = vcmask 261120
        %v1169 = vsel %vm1167, %v1152, 0
        %1171 = vmatprep.subr.mxu0 0.0
        %1172 = vmatpush1.msra.mxu0 0.0
        %1173 = vmatprep.subr.mxu0 0.0
        %1174 = vmatpush1.msra.mxu0 0.0
        %1175 = vmatprep.subr.mxu0 0.0
        %1176 = vmatpush1.msra.mxu0 0.0
        %1177 = vmatprep.subr.mxu0 0.0
        %1178 = vmatpush1.msra.mxu0 0.0
        %1179 = vmatprep.subr.mxu0 0.0
        %1180 = vmatpush1.msra.mxu0 0.0
        %1181 = vmatprep.subr.mxu0 0.0
        %1182 = vmatpush1.msra.mxu0 0.0
        %1183 = vmatprep.subr.mxu0 0.0
        %1184 = vmatpush1.msra.mxu0 0.0
        %1185 = vmatprep.subr.mxu0 0.0
        %1186 = vmatpush1.msra.mxu0 0.0
        %1187 = vmatprep.subr.mxu0 0.0
        %1188 = vmatpush1.msra.mxu0 0.0
        %1189 = vmatprep.subr.mxu0 0.0
        %1190 = vmatpush1.msra.mxu0 0.0
        %1191 = vmatprep.subr.mxu0 0.0
        %1192 = vmatpush1.msra.mxu0 0.0
        %1193 = vmatprep.subr.mxu0 0.0
        %1194 = vmatpush1.msra.mxu0 0.0
        %1195 = vmatprep.subr.mxu0 %v1165
        %1196 = vmatpush1.msra.mxu0 %v1164
        %1197 = vmatprep.subr.mxu0 %v1162
        %1198 = vmatpush1.msra.mxu0 %v1161
        %1199 = vmatprep.subr.mxu0 %v1159
        %1200 = vmatpush1.msra.mxu0 %v1158
        %1201 = vmatprep.subr.mxu0 %v1156
        %1202 = vmatpush1.msra.mxu0 %v1155
        %1203 = vmatprep.subr.mxu0 0.0
        %1204 = vmatpush2.msra.mxu0 0.0
        %1205 = vmatprep.subr.mxu0 0.0
        %1206 = vmatpush2.msra.mxu0 0.0
        %1207 = vmatprep.subr.mxu0 0.0
        %1208 = vmatpush2.msra.mxu0 0.0
        %1209 = vmatprep.subr.mxu0 0.0
        %1210 = vmatpush2.msra.mxu0 0.0
        %1211 = vmatprep.subr.mxu0 0.0
        %1212 = vmatpush2.msra.mxu0 0.0
        %1213 = vmatprep.subr.mxu0 0.0
        %1214 = vmatpush2.msra.mxu0 0.0
        %1215 = vmatprep.subr.mxu0 0.0
        %1216 = vmatpush2.msra.mxu0 0.0
        %1217 = vmatprep.subr.mxu0 0.0
        %1218 = vmatpush2.msra.mxu0 0.0
        %1219 = vmatprep.subr.mxu0 0.0
        %1220 = vmatpush2.msra.mxu0 0.0
        %1221 = vmatprep.subr.mxu0 0.0
        %1222 = vmatpush2.msra.mxu0 0.0
        %1223 = vmatprep.subr.mxu0 0.0
        %1224 = vmatpush2.msra.mxu0 0.0
        %1225 = vmatprep.subr.mxu0 0.0
        %1226 = vmatpush2.msra.mxu0 0.0
        %1227 = vmatprep.subr.mxu0 0.0
        %1228 = vmatpush2.msra.mxu0 0.0
        %1229 = vmatprep.subr.mxu0 0.0
        %1230 = vmatpush2.msra.mxu0 0.0
        %1231 = vmatprep.subr.mxu0 0.0
        %1232 = vmatpush2.msra.mxu0 0.0
        %1233 = vmatprep.subr.mxu0 0.0
        %1234 = vmatpush2.msra.mxu0 0.0
        %1235 = vmatprep.mubr.f32.mxu0 0.0
        %1236 = vmatmul.mubr.f32.gmra.mxu0 %v1169
        %v1237 = vpop.f32.mrf.mxu0
        %v1238 = vadd.f32 0.0, %v1237
        %v1239 = vpop.f32.mrf.mxu0
        %v1240 = vadd.f32 0.0, %v1239
        %1241 = vdwg.mxu0
        %1242 = vmatprep.subr.mxu0 0.0
        %1243 = vmatpush1.msra.mxu0 0.0
        %1244 = vmatprep.subr.mxu0 0.0
        %1245 = vmatpush1.msra.mxu0 0.0
        %1246 = vmatprep.subr.mxu0 0.0
        %1247 = vmatpush1.msra.mxu0 0.0
        %1248 = vmatprep.subr.mxu0 0.0
        %1249 = vmatpush1.msra.mxu0 0.0
        %1250 = vmatprep.subr.mxu0 0.0
        %1251 = vmatpush1.msra.mxu0 0.0
        %1252 = vmatprep.subr.mxu0 0.0
        %1253 = vmatpush1.msra.mxu0 0.0
        %1254 = vmatprep.subr.mxu0 0.0
        %1255 = vmatpush1.msra.mxu0 0.0
        %1256 = vmatprep.subr.mxu0 0.0
        %1257 = vmatpush1.msra.mxu0 0.0
        %1258 = vmatprep.subr.mxu0 0.0
        %1259 = vmatpush1.msra.mxu0 0.0
        %1260 = vmatprep.subr.mxu0 0.0
        %1261 = vmatpush1.msra.mxu0 0.0
        %1262 = vmatprep.subr.mxu0 0.0
        %1263 = vmatpush1.msra.mxu0 0.0
        %1264 = vmatprep.subr.mxu0 0.0
        %1265 = vmatpush1.msra.mxu0 0.0
        %1266 = vmatprep.subr.mxu0 0.0
        %1267 = vmatpush1.msra.mxu0 %v1166
        %1268 = vmatprep.subr.mxu0 0.0
        %1269 = vmatpush1.msra.mxu0 %v1163
        %1270 = vmatprep.subr.mxu0 0.0
        %1271 = vmatpush1.msra.mxu0 %v1160
        %1272 = vmatprep.subr.mxu0 0.0
        %1273 = vmatpush1.msra.mxu0 %v1157
        %1274 = vmatprep.subr.mxu0 0.0
        %1275 = vmatpush2.msra.mxu0 0.0
        %1276 = vmatprep.subr.mxu0 0.0
        %1277 = vmatpush2.msra.mxu0 0.0
        %1278 = vmatprep.subr.mxu0 0.0
        %1279 = vmatpush2.msra.mxu0 0.0
        %1280 = vmatprep.subr.mxu0 0.0
        %1281 = vmatpush2.msra.mxu0 0.0
        %1282 = vmatprep.subr.mxu0 0.0
        %1283 = vmatpush2.msra.mxu0 0.0
        %1284 = vmatprep.subr.mxu0 0.0
        %1285 = vmatpush2.msra.mxu0 0.0
        %1286 = vmatprep.subr.mxu0 0.0
        %1287 = vmatpush2.msra.mxu0 0.0
        %1288 = vmatprep.subr.mxu0 0.0
        %1289 = vmatpush2.msra.mxu0 0.0
        %1290 = vmatprep.subr.mxu0 0.0
        %1291 = vmatpush2.msra.mxu0 0.0
        %1292 = vmatprep.subr.mxu0 0.0
        %1293 = vmatpush2.msra.mxu0 0.0
        %1294 = vmatprep.subr.mxu0 0.0
        %1295 = vmatpush2.msra.mxu0 0.0
        %1296 = vmatprep.subr.mxu0 0.0
        %1297 = vmatpush2.msra.mxu0 0.0
        %1298 = vmatprep.subr.mxu0 0.0
        %1299 = vmatpush2.msra.mxu0 0.0
        %1300 = vmatprep.subr.mxu0 0.0
        %1301 = vmatpush2.msra.mxu0 0.0
        %1302 = vmatprep.subr.mxu0 0.0
        %1303 = vmatpush2.msra.mxu0 0.0
        %1304 = vmatprep.subr.mxu0 0.0
        %1305 = vmatpush2.msra.mxu0 0.0
        %1306 = vmatprep.mubr.f32.mxu0 0.0
        %1307 = vmatmul.mubr.f32.gmra.mxu0 %v1169
        %v1308 = vpop.f32.mrf.mxu0
        %v1309 = vadd.f32 0.0, %v1308
        %v1310 = vpop.f32.mrf.mxu0
        %1311 = vdwg.mxu0
        %v1312 = vsub.f32 0.0, %v1238
        %v1313 = vsub.f32 0.0, %v1240
        %v1314 = vmul.f32 %v1312, 1.442695
        %v1315 = vpow.pop %v1314
        %v1316 = vmul.f32 %v1313, 1.442695
        %v1317 = vpow.pop %v1316
        %v1318 = vadd.f32 %v1315, 1.0
        %v1319 = vadd.f32 %v1317, 1.0
        %v1320 = vrcp.pop %v1318
        %v1321 = vrcp.pop %v1319
        %v1322 = vmax.f32 %v1320, 0.0
        %v1323 = vmax.f32 %v1321, 0.0
        %v1324 = vmin.f32 %v1322, 1.0
        %v1325 = vmin.f32 %v1323, 1.0
        %1326 = vst [vmem:[%s221] sm:$0xff] %v1324
        %1327 = vst [vmem:[%s221 + $0x8] sm:$0xff] %v1325
        %v1328 = vsub.f32 0.0, %v1309
        %v1329 = vmul.f32 %v1328, 1.442695
        %v1330 = vpow.pop %v1329
        %v1331 = vadd.f32 %v1330, 1.0
        %v1332 = vrcp.pop %v1331
        %v1333 = vmax.f32 %v1332, 0.0
        %v1334 = vmin.f32 %v1333, 1.0
        %v1335 = vmul.f32 %v1334, 16.0
        %v1336 = vsub.f32 16.0, %v1335
        %1338 = vrot.lane.b32.xlu0 %v1336, 2
        %v1339 = vpop.permute.xlu0 %1338
        %v1341 = vmul.f32 %v1334, %v1339
        %1343 = vrot.lane.b32.xlu0 %v1341, 126
        %v1344 = vpop.permute.xlu0 %1343
        %v1346 = vadd.f32 %v1335, %v1344
        %vm1347 = vcmask 64512
        %v1348 = vsel %vm1347, %v1309, -inf
        %1349 = vmax.xlane.f32.xlu0 %v1348
        %v1350 = vpop.xlane.xlu0 %1349
        %v1351 = vsub.f32 %v1309, %v1350
        %v1352 = vmul.f32 %v1351, 1.442695
        %v1353 = vpow.pop %v1352
        %v1354 = vsel %vm1347, %v1353, 0.0
        %1355 = vadd.xlane.f32.xlu0 %v1354
        %v1356 = vpop.xlane.xlu0 %1355
        %v1357 = vrcp.pop %v1356
        %v1358 = vmax.f32 %v1357, 0.0
        %v1359 = vmin.f32 %v1358, 1.0
        %v1360 = vlaneseq
        %v1361 = vand.u32 %v1360, 127
        %vm1362 = vcmp.eq.f32.partialorder %v1309, %v1350
        %v1363 = vsel %vm1362, %v1361, 8
        %v1364 = vsel %vm1347, %v1363, 2147483647
        %v1365 = vand.u32 %v1364, 65535
        %v1366 = vshra.s32 %v1364, 16
        %v1367 = vcvt.s32.f32 %v1365
        %v1368 = vcvt.s32.f32 %v1366
        %1369 = vmin.xlane.f32.xlu0 %v1368
        %v1370 = vpop.xlane.xlu0 %1369
        %vm1371 = vcmp.eq.f32.partialorder %v1368, %v1370
        %v1372 = vsel %vm1371, %v1367, inf
        %1373 = vmin.xlane.f32.xlu0 %v1372
        %v1374 = vpop.xlane.xlu0 %1373
        %v1375 = vcvt.f32.s32 %v1374
        %v1376 = vcvt.f32.s32 %v1370
        %v1377 = vshll.u32 %v1376, 16
        %v1378 = vadd.s32 %v1377, %v1375
        %v1379 = vcvt.s32.f32 %v1378
        %vm1380 = vcmp.eq.s32.totalorder %v1361, 0
        %1382 = vset.pattern.permute.xlu0 8
        %1383 = vperm.xlu0 %1382, %v1335
        %v1384 = vpop.permute.xlu0 %1383
        %v1386 = vsel %vm1380, %v1384, 0.0
        %vm1387 = vcmp.eq.s32.totalorder %v1361, 1
        %1388 = vset.pattern.permute.xlu0 9
        %1389 = vperm.xlu0 %1388, %v1335
        %v1390 = vpop.permute.xlu0 %1389
        %v1392 = vsel %vm1387, %v1390, 0.0
        %v1393 = vadd.f32 %v1386, %v1392
        %vm1394 = vcmp.eq.s32.totalorder %v1361, 2
        %1396 = vset.pattern.permute.xlu0 8
        %1397 = vperm.xlu0 %1396, %v1346
        %v1398 = vpop.permute.xlu0 %1397
        %v1400 = vsel %vm1394, %v1398, 0.0
        %v1401 = vadd.f32 %v1393, %v1400
        %vm1402 = vcmp.eq.s32.totalorder %v1361, 3
        %1403 = vset.pattern.permute.xlu0 9
        %1404 = vperm.xlu0 %1403, %v1346
        %v1405 = vpop.permute.xlu0 %1404
        %v1407 = vsel %vm1402, %v1405, 0.0
        %v1408 = vadd.f32 %v1401, %v1407
        %vm1409 = vcmp.eq.s32.totalorder %v1361, 4
        %v1410 = vsel %vm1409, %v1359, 0.0
        %v1411 = vadd.f32 %v1408, %v1410
        %vm1412 = vcmp.eq.s32.totalorder %v1361, 5
        %v1413 = vsel %vm1412, %v1379, 0.0
        %v1414 = vadd.f32 %v1411, %v1413
        %1415 = vst [vmem:[%s228] sm:$0xff] %v1414
        %s1416 = sand.u32 %s120, 1
        %s1417 = scalar_lea.sflag [#allocation3], %s1416
        %s1418 = sand.u32 %s120, 1
        %s1419 = smul.addr %s1418, 16
        %s1420 = scalar_lea.vmem [#allocation2], %s1419
        %s1421 = sand.u32 %s146, 1
        %s1422 = scalar_lea.sflag [#allocation5], %s1421
        %s1423 = sand.u32 %s146, 1
        %s1424 = smul.addr %s1423, 8
        %s1425 = scalar_lea.vmem [#allocation4], %s1424
        // Predicated region
        $region37: #{tpu_custom_call.1} parent=35 // pred_check
          %p1426 = pneg %p130
        $region38: #{tpu_custom_call.1} parent=35 // pred_check_branch
          %1428 = sbr.rel (%p1426) target = $region40
        $region39: #{tpu_custom_call.1} parent=35 // pred_region
          %s1430 = ssub.s32 256, 256
          %1431 = vsyncadd %s1417, %s1430
          %s1432 = smul.addr %s23, 2
          %s1433 = smul.addr %s1432, 128
          %s1434 = scalar_lea.hbm %s4, %s1433
          %s1436 = sshll.u32 %s1420, 4
          %s1437 = int_to_ptr.vmem [resolvable:$true] %s1436
          %1439 = dma.vmem_to_hbm [thread:$0]  %s1437, 256, %s1434, %s1417
        $region40: #{tpu_custom_call.1} parent=35 // pred_fallthru
          _
        // Predicated region
        $region41: #{tpu_custom_call.1} parent=35 // pred_check
          %p1440 = pneg %p156
        $region42: #{tpu_custom_call.1} parent=35 // pred_check_branch
          %1442 = sbr.rel (%p1440) target = $region44
        $region43: #{tpu_custom_call.1} parent=35 // pred_region
          %s1444 = ssub.s32 128, 128
          %1445 = vsyncadd %s1422, %s1444
          %s1446 = smul.addr %s23, 128
          %s1447 = scalar_lea.hbm %s5, %s1446
          %s1449 = sshll.u32 %s1425, 4
          %s1450 = int_to_ptr.vmem [resolvable:$true] %s1449
          %1452 = dma.vmem_to_hbm [thread:$0]  %s1450, 128, %s1447, %s1422
        $region44: #{tpu_custom_call.1} parent=35 // pred_fallthru
          _
      $region36: #{tpu_custom_call.1} parent=5 // pred_fallthru
        _
      %p1453 = scmp.le.s32.totalorder 2, %s18
      // Predicated region
      $region45: #{tpu_custom_call.1} parent=5 // pred_check
        %p1454 = pneg %p1453
      $region46: #{tpu_custom_call.1} parent=5 // pred_check_branch
        %1456 = sbr.rel (%p1454) target = $region48
      $region47: #{tpu_custom_call.1} parent=5 // pred_region
        %s1457 = ssub.s32 %s18, 2
        // Predicated region
        $region49: #{tpu_custom_call.1} parent=47 // pred_check
          %p1458 = pneg %p136
        $region50: #{tpu_custom_call.1} parent=47 // pred_check_branch
          %1460 = sbr.rel (%p1458) target = $region52
        $region51: #{tpu_custom_call.1} parent=47 // pred_region
          %s1461 = sand.u32 %s121, 1
          %s1462 = scalar_lea.sflag [#allocation3], %s1461
          %s1463 = sand.u32 %s121, 1
          %s1464 = smul.addr %s1463, 16
          %s1465 = scalar_lea.vmem [#allocation2], %s1464
          %1466 = dma.done %s1462, 256
        $region52: #{tpu_custom_call.1} parent=47 // pred_fallthru
          _
        // Predicated region
        $region53: #{tpu_custom_call.1} parent=47 // pred_check
          %p1467 = pneg %p162
        $region54: #{tpu_custom_call.1} parent=47 // pred_check_branch
          %1469 = sbr.rel (%p1467) target = $region56
        $region55: #{tpu_custom_call.1} parent=47 // pred_region
          %s1470 = sand.u32 %s147, 1
          %s1471 = scalar_lea.sflag [#allocation5], %s1470
          %s1472 = sand.u32 %s147, 1
          %s1473 = smul.addr %s1472, 8
          %s1474 = scalar_lea.vmem [#allocation4], %s1473
          %1475 = dma.done %s1471, 128
        $region56: #{tpu_custom_call.1} parent=47 // pred_fallthru
          _
      $region48: #{tpu_custom_call.1} parent=5 // pred_fallthru
        _
    $region6: #{tpu_custom_call.1} parent=1 // loop_footer
      %s22 = sadd.s32 1, %s18
    $region7: #{tpu_custom_call.1} parent=1 // loop_footer_branch
      %17 = sbr.rel target = $region3
    $region8: #{tpu_custom_call.1} parent=1 // loop_exit
      _
    %1476 = vsyncpa [#allocation3], 1
    %s1477 = scalar_lea.sflag [#allocation3], 1
    %1478 = vsyncpa %s1477, 1
    %1479 = vsyncpa [#allocation5], 1
    %s1480 = scalar_lea.sflag [#allocation5], 1
    %1481 = vsyncpa %s1480, 1

</llo_original>
